<compile_context>
chip_gen: v7x
topology: tpu7x:2x2x1
jax: 0.10.0
libtpu: 0.0.40
codegen_flags: <defaults>
</compile_context>

<pallas_src>
import math
import functools

import jax
import jax.numpy as jnp
from jax.experimental import pallas as pl
from jax.experimental.pallas import tpu as pltpu


def _round_up(x, m):
    return (x + m - 1) // m * m


def _mlp_kernel(n_mid, audio_ref, text_ref, *refs):
    """Fused MLP over one batch tile.

    refs = (w0_audio, w0_text, [w_mid], w_head, biases, o_ref)
      w0_audio : [A, L]         bf16
      w0_text  : [T, L]         bf16
      w_mid    : [n_mid, L, L]  bf16   (omitted when n_mid == 0)
      w_head   : [L, OUT_PAD]   bf16   (zero-padded columns beyond out_dim)
      biases   : [n_mid + 2, BW] f32   (row 0 = b0, rows 1..n_mid = mid, last = head)
      o_ref    : [TILE_B, OUT_PAD] f32
    """
    if n_mid > 0:
        w0a_ref, w0t_ref, wmid_ref, whead_ref, bias_ref, o_ref = refs
    else:
        w0a_ref, w0t_ref, whead_ref, bias_ref, o_ref = refs
        wmid_ref = None

    L = w0a_ref.shape[1]
    out_pad = whead_ref.shape[1]

    # Layer 0: the (audio, text) concat is realized by splitting W0.
    h = (
        jnp.dot(audio_ref[...].astype(jnp.bfloat16), w0a_ref[...],
                preferred_element_type=jnp.float32)
        + jnp.dot(text_ref[...].astype(jnp.bfloat16), w0t_ref[...],
                  preferred_element_type=jnp.float32)
        + bias_ref[0:1, :L]
    )
    h = jnp.maximum(h, 0.0)

    # Remaining hidden layers (square [L, L] weights, stacked in one array).
    for i in range(n_mid):
        h = jnp.maximum(
            jnp.dot(h.astype(jnp.bfloat16), wmid_ref[i],
                    preferred_element_type=jnp.float32)
            + bias_ref[i + 1:i + 2, :L],
            0.0,
        )

    # Prediction head (lane-dense, padded output width).
    out = (
        jnp.dot(h.astype(jnp.bfloat16), whead_ref[...],
                preferred_element_type=jnp.float32)
        + bias_ref[n_mid + 1:n_mid + 2, :out_pad]
    )
    o_ref[...] = out.astype(o_ref.dtype)


def prepare_params(params, audio_dim, prob_grid_size):
    """One-time preprocessing (outside the hot path):
    split W0 on the concat boundary, cast weights to bf16, stack the square
    hidden weights, pad the head to a lane-dense width, and pack all biases
    into a single f32 array."""
    n_hidden = len(params) - 1          # last (w, b) pair is the prediction head
    n_mid = n_hidden - 1
    L = params[0][0].shape[1]
    out_dim = prob_grid_size ** 2
    out_pad = _round_up(max(out_dim, 128), 128)

    w0, _ = params[0]
    w0a = w0[:audio_dim].astype(jnp.bfloat16)
    w0t = w0[audio_dim:].astype(jnp.bfloat16)

    w_mid = None
    if n_mid > 0:
        w_mid = jnp.stack([params[i][0] for i in range(1, n_hidden)]
                          ).astype(jnp.bfloat16)

    w_head, b_head = params[-1]
    w_head_p = jnp.zeros((L, out_pad), jnp.bfloat16)
    w_head_p = w_head_p.at[:, :out_dim].set(w_head.astype(jnp.bfloat16))

    bw = max(L, out_pad)
    biases = jnp.zeros((n_hidden + 1, bw), jnp.float32)
    for i in range(n_hidden):
        biases = biases.at[i, :L].set(params[i][1].reshape(-1))
    biases = biases.at[n_hidden, :out_dim].set(b_head.reshape(-1))

    return dict(n_mid=n_mid, out_dim=out_dim, out_pad=out_pad,
                w0a=w0a, w0t=w0t, w_mid=w_mid, w_head=w_head_p, biases=biases)


def generic_model_forward(audio, text, prep, tile_b=128):
    """predict_dist=True forward pass. Dropout(p=0.2) = identity (inference)."""
    B = audio.shape[0]
    A, T = audio.shape[1], text.shape[1]
    n_mid = prep["n_mid"]
    out_dim, out_pad = prep["out_dim"], prep["out_pad"]

    # Batch tiling: full batch if small, else TILE_B rows per grid step
    # (pad B up to a multiple of the tile if needed).
    if B <= tile_b:
        tb, b_pad = B, B
    else:
        tb = tile_b
        b_pad = _round_up(B, tb)
    if b_pad != B:
        pad = b_pad - B
        audio = jnp.pad(audio, ((0, pad), (0, 0)))
        text = jnp.pad(text, ((0, pad), (0, 0)))

    # Weights/biases: constant index_map -> fetched once, resident across tiles.
    weight_args = [prep["w0a"], prep["w0t"]]
    weight_specs = [
        pl.BlockSpec(prep["w0a"].shape, lambda i: (0, 0)),
        pl.BlockSpec(prep["w0t"].shape, lambda i: (0, 0)),
    ]
    if n_mid > 0:
        weight_args.append(prep["w_mid"])
        weight_specs.append(pl.BlockSpec(prep["w_mid"].shape, lambda i: (0, 0, 0)))
    weight_args += [prep["w_head"], prep["biases"]]
    weight_specs += [
        pl.BlockSpec(prep["w_head"].shape, lambda i: (0, 0)),
        pl.BlockSpec(prep["biases"].shape, lambda i: (0, 0)),
    ]

    kernel = functools.partial(_mlp_kernel, n_mid)

    out = pl.pallas_call(
        kernel,
        grid=(b_pad // tb,),
        in_specs=[
            pl.BlockSpec((tb, A), lambda i: (i, 0)),
            pl.BlockSpec((tb, T), lambda i: (i, 0)),
            *weight_specs,
        ],
        out_specs=pl.BlockSpec((tb, out_pad), lambda i: (i, 0)),
        out_shape=jax.ShapeDtypeStruct((b_pad, out_pad), jnp.float32),
        compiler_params=pltpu.CompilerParams(
            dimension_semantics=("parallel",)),
    )(audio, text, *weight_args)

    return out[:B, :out_dim]


def init_params(key, dense_layers, layer_size, prob_grid_size,
                input_size=768 + 512):
    """Deterministic parameter init mimicking nn.Linear (uniform +-1/sqrt(fan_in)).
    Weights are stored [F_in, F_out] (PyTorch's [out, in] pre-transposed)."""
    num_fully_shared = dense_layers + 1  # predict_dist=True
    params = []
    in_dim = input_size
    for _ in range(num_fully_shared):
        key, k_w, k_b = jax.random.split(key, 3)
        bound = 1.0 / math.sqrt(in_dim)
        w = jax.random.uniform(k_w, (in_dim, layer_size), jnp.float32, -bound, bound)
        b = jax.random.uniform(k_b, (1, layer_size), jnp.float32, -bound, bound)
        params.append((w, b))
        in_dim = layer_size
    # prediction_head: Linear(layer_size, prob_grid_size ** 2)
    key, k_w, k_b = jax.random.split(key, 3)
    bound = 1.0 / math.sqrt(in_dim)
    w = jax.random.uniform(k_w, (in_dim, prob_grid_size ** 2), jnp.float32, -bound, bound)
    b = jax.random.uniform(k_b, (1, prob_grid_size ** 2), jnp.float32, -bound, bound)
    params.append((w, b))
    return params


if __name__ == "__main__":
    # TODO(synk): predict_dist=False branch (AnnotatorOutputLayer, OneHotLayer,
    # kde_probability_bs) not implemented -- those helpers were not provided.
    key = jax.random.PRNGKey(0)
    k_audio, k_text, k_params = jax.random.split(key, 3)

    B = 256               # 2 batch tiles of 128 -> exercises the pipelined grid
    dense_layers = 2      # -> 3 fully-shared Linear+ReLU layers
    layer_size = 128
    prob_grid_size = 4    # head output = 16

    audio = jax.random.normal(k_audio, (B, 512), jnp.float32)
    text = jax.random.normal(k_text, (B, 768), jnp.float32)
    params = init_params(k_params, dense_layers, layer_size, prob_grid_size)
    prep = prepare_params(params, audio_dim=512, prob_grid_size=prob_grid_size)

    out = generic_model_forward(audio, text, prep, tile_b=128)
    jax.block_until_ready(out)
    assert out.shape == (B, prob_grid_size ** 2)

    # Reference 1: bf16-faithful (same casts as the kernel) -> tight tolerance.
    def ref_bf16(audio, text, params):
        w0, b0 = params[0]
        w0a = w0[:512].astype(jnp.bfloat16)
        w0t = w0[512:].astype(jnp.bfloat16)
        h = (jnp.dot(audio.astype(jnp.bfloat16), w0a, preferred_element_type=jnp.float32)
             + jnp.dot(text.astype(jnp.bfloat16), w0t, preferred_element_type=jnp.float32)
             + b0)
        h = jnp.maximum(h, 0.0)
        for w, b in params[1:-1]:
            h = jnp.maximum(
                jnp.dot(h.astype(jnp.bfloat16), w.astype(jnp.bfloat16),
                        preferred_element_type=jnp.float32) + b, 0.0)
        w, b = params[-1]
        return jnp.dot(h.astype(jnp.bfloat16), w.astype(jnp.bfloat16),
                       preferred_element_type=jnp.float32) + b

    ref16 = ref_bf16(audio, text, params)
    assert jnp.allclose(out, ref16, atol=5e-3, rtol=5e-3), \
        f"bf16-ref mismatch, max abs err {float(jnp.max(jnp.abs(out - ref16)))}"

    # Reference 2: full-f32 PyTorch semantics -> looser tolerance (bf16 weights).
    x32 = jnp.concatenate([audio, text], axis=1)
    for w, b in params[:-1]:
        x32 = jnp.maximum(x32 @ w + b, 0.0)
    ref32 = x32 @ params[-1][0] + params[-1][1]
    assert jnp.allclose(out, ref32, atol=5e-2, rtol=5e-2), \
        f"f32-ref mismatch, max abs err {float(jnp.max(jnp.abs(out - ref32)))}"

    print("KERNEL_OK")
</pallas_src>

<mosaic_0001>
module attributes {stable_mosaic.version = 11 : i64} {
  func.func @_mlp_kernel(%arg0: i32, %arg1: memref<128x512xf32, #tpu.memory_space<vmem>>, %arg2: memref<128x768xf32, #tpu.memory_space<vmem>>, %arg3: memref<512x128xbf16, #tpu.memory_space<vmem>>, %arg4: memref<768x128xbf16, #tpu.memory_space<vmem>>, %arg5: memref<2x128x128xbf16, #tpu.memory_space<vmem>>, %arg6: memref<128x128xbf16, #tpu.memory_space<vmem>>, %arg7: memref<4x128xf32, #tpu.memory_space<vmem>>, %arg8: memref<128x128xf32, #tpu.memory_space<vmem>>) attributes {dimension_semantics = [#tpu.dimension_semantics<parallel>], iteration_bounds = array<i64: 2>, scalar_prefetch = 0 : i64, scratch_operands = 0 : i64, tpu.core_type = #tpu.core_type<tc>, window_params = [{transform_indices = @transform_0, window_bounds = array<i64: 128, 512>}, {transform_indices = @transform_1, window_bounds = array<i64: 128, 768>}, {pipeline_mode = #tpu.pipeline_mode<synchronous>, transform_indices = @transform_2, window_bounds = array<i64: 512, 128>}, {pipeline_mode = #tpu.pipeline_mode<synchronous>, transform_indices = @transform_3, window_bounds = array<i64: 768, 128>}, {pipeline_mode = #tpu.pipeline_mode<synchronous>, transform_indices = @transform_4, window_bounds = array<i64: 2, 128, 128>}, {pipeline_mode = #tpu.pipeline_mode<synchronous>, transform_indices = @transform_5, window_bounds = array<i64: 128, 128>}, {pipeline_mode = #tpu.pipeline_mode<synchronous>, transform_indices = @transform_6, window_bounds = array<i64: 4, 128>}, {transform_indices = @transform_7, window_bounds = array<i64: 128, 128>}]} {
    %c0 = arith.constant 0 : index
    %c0_0 = arith.constant 0 : index
    %0 = vector.load %arg1[%c0, %c0_0] : memref<128x512xf32, #tpu.memory_space<vmem>>, vector<128x512xf32>
    %1 = arith.truncf %0 : vector<128x512xf32> to vector<128x512xbf16>
    %c0_1 = arith.constant 0 : index
    %c0_2 = arith.constant 0 : index
    %2 = vector.load %arg3[%c0_1, %c0_2] : memref<512x128xbf16, #tpu.memory_space<vmem>>, vector<512x128xbf16>
    %cst = arith.constant dense<0.000000e+00> : vector<128x128xf32>
    %3 = tpu.matmul %1, %2, %cst {dimension_numbers = #tpu.dot_dimension_numbers<[1], [0], [0], [1], [0, 0, 1, 1], [], []>} : vector<128x512xbf16>, vector<512x128xbf16>, vector<128x128xf32> -> vector<128x128xf32>
    %c0_3 = arith.constant 0 : index
    %c0_4 = arith.constant 0 : index
    %4 = vector.load %arg2[%c0_3, %c0_4] : memref<128x768xf32, #tpu.memory_space<vmem>>, vector<128x768xf32>
    %5 = arith.truncf %4 : vector<128x768xf32> to vector<128x768xbf16>
    %c0_5 = arith.constant 0 : index
    %c0_6 = arith.constant 0 : index
    %6 = vector.load %arg4[%c0_5, %c0_6] : memref<768x128xbf16, #tpu.memory_space<vmem>>, vector<768x128xbf16>
    %cst_7 = arith.constant dense<0.000000e+00> : vector<128x128xf32>
    %7 = tpu.matmul %5, %6, %cst_7 {dimension_numbers = #tpu.dot_dimension_numbers<[1], [0], [0], [1], [0, 0, 1, 1], [], []>} : vector<128x768xbf16>, vector<768x128xbf16>, vector<128x128xf32> -> vector<128x128xf32>
    %8 = arith.addf %3, %7 : vector<128x128xf32>
    %c0_8 = arith.constant 0 : index
    %c0_9 = arith.constant 0 : index
    %9 = vector.load %arg7[%c0_8, %c0_9] : memref<4x128xf32, #tpu.memory_space<vmem>>, vector<1x128xf32>
    %10 = vector.broadcast %9 : vector<1x128xf32> to vector<128x128xf32>
    %11 = arith.addf %8, %10 : vector<128x128xf32>
    %cst_10 = arith.constant 0.000000e+00 : f32
    %12 = vector.broadcast %cst_10 : f32 to vector<128x128xf32>
    %13 = arith.maximumf %11, %12 : vector<128x128xf32>
    %14 = arith.truncf %13 : vector<128x128xf32> to vector<128x128xbf16>
    %c0_11 = arith.constant 0 : index
    %c0_12 = arith.constant 0 : index
    %c0_13 = arith.constant 0 : index
    %15 = vector.load %arg5[%c0_11, %c0_12, %c0_13] : memref<2x128x128xbf16, #tpu.memory_space<vmem>>, vector<1x128x128xbf16>
    %16 = vector.shape_cast %15 : vector<1x128x128xbf16> to vector<128x128xbf16>
    %cst_14 = arith.constant dense<0.000000e+00> : vector<128x128xf32>
    %17 = tpu.matmul %14, %16, %cst_14 {dimension_numbers = #tpu.dot_dimension_numbers<[1], [0], [0], [1], [0, 0, 1, 1], [], []>} : vector<128x128xbf16>, vector<128x128xbf16>, vector<128x128xf32> -> vector<128x128xf32>
    %c1 = arith.constant 1 : index
    %c0_15 = arith.constant 0 : index
    %18 = vector.load %arg7[%c1, %c0_15] : memref<4x128xf32, #tpu.memory_space<vmem>>, vector<1x128xf32>
    %19 = vector.broadcast %18 : vector<1x128xf32> to vector<128x128xf32>
    %20 = arith.addf %17, %19 : vector<128x128xf32>
    %cst_16 = arith.constant 0.000000e+00 : f32
    %21 = vector.broadcast %cst_16 : f32 to vector<128x128xf32>
    %22 = arith.maximumf %20, %21 : vector<128x128xf32>
    %23 = arith.truncf %22 : vector<128x128xf32> to vector<128x128xbf16>
    %c1_17 = arith.constant 1 : index
    %c0_18 = arith.constant 0 : index
    %c0_19 = arith.constant 0 : index
    %24 = vector.load %arg5[%c1_17, %c0_18, %c0_19] : memref<2x128x128xbf16, #tpu.memory_space<vmem>>, vector<1x128x128xbf16>
    %25 = vector.shape_cast %24 : vector<1x128x128xbf16> to vector<128x128xbf16>
    %cst_20 = arith.constant dense<0.000000e+00> : vector<128x128xf32>
    %26 = tpu.matmul %23, %25, %cst_20 {dimension_numbers = #tpu.dot_dimension_numbers<[1], [0], [0], [1], [0, 0, 1, 1], [], []>} : vector<128x128xbf16>, vector<128x128xbf16>, vector<128x128xf32> -> vector<128x128xf32>
    %c2 = arith.constant 2 : index
    %c0_21 = arith.constant 0 : index
    %27 = vector.load %arg7[%c2, %c0_21] : memref<4x128xf32, #tpu.memory_space<vmem>>, vector<1x128xf32>
    %28 = vector.broadcast %27 : vector<1x128xf32> to vector<128x128xf32>
    %29 = arith.addf %26, %28 : vector<128x128xf32>
    %cst_22 = arith.constant 0.000000e+00 : f32
    %30 = vector.broadcast %cst_22 : f32 to vector<128x128xf32>
    %31 = arith.maximumf %29, %30 : vector<128x128xf32>
    %32 = arith.truncf %31 : vector<128x128xf32> to vector<128x128xbf16>
    %c0_23 = arith.constant 0 : index
    %c0_24 = arith.constant 0 : index
    %33 = vector.load %arg6[%c0_23, %c0_24] : memref<128x128xbf16, #tpu.memory_space<vmem>>, vector<128x128xbf16>
    %cst_25 = arith.constant dense<0.000000e+00> : vector<128x128xf32>
    %34 = tpu.matmul %32, %33, %cst_25 {dimension_numbers = #tpu.dot_dimension_numbers<[1], [0], [0], [1], [0, 0, 1, 1], [], []>} : vector<128x128xbf16>, vector<128x128xbf16>, vector<128x128xf32> -> vector<128x128xf32>
    %c3 = arith.constant 3 : index
    %c0_26 = arith.constant 0 : index
    %35 = vector.load %arg7[%c3, %c0_26] : memref<4x128xf32, #tpu.memory_space<vmem>>, vector<1x128xf32>
    %36 = vector.broadcast %35 : vector<1x128xf32> to vector<128x128xf32>
    %37 = arith.addf %34, %36 : vector<128x128xf32>
    %c0_27 = arith.constant 0 : index
    %c0_28 = arith.constant 0 : index
    %38 = vector.load %arg8[%c0_27, %c0_28] : memref<128x128xf32, #tpu.memory_space<vmem>>, vector<128x128xf32>
    tpu.vector_store %arg8[%c0_27, %c0_28], %37 {strides = array<i32>} : memref<128x128xf32, #tpu.memory_space<vmem>>, vector<128x128xf32>,
    return
  }
  func.func @transform_0(%arg0: i32) -> (i32, i32) {
    %c0_i32 = arith.constant 0 : i32
    %c0_i32_0 = arith.constant 0 : i32
    return %arg0, %c0_i32 : i32, i32
  }
  func.func @transform_1(%arg0: i32) -> (i32, i32) {
    %c0_i32 = arith.constant 0 : i32
    %c0_i32_0 = arith.constant 0 : i32
    return %arg0, %c0_i32 : i32, i32
  }
  func.func @transform_2(%arg0: i32) -> (i32, i32) {
    %c0_i32 = arith.constant 0 : i32
    %c0_i32_0 = arith.constant 0 : i32
    %c0_i32_1 = arith.constant 0 : i32
    return %c0_i32, %c0_i32_0 : i32, i32
  }
  func.func @transform_3(%arg0: i32) -> (i32, i32) {
    %c0_i32 = arith.constant 0 : i32
    %c0_i32_0 = arith.constant 0 : i32
    %c0_i32_1 = arith.constant 0 : i32
    return %c0_i32, %c0_i32_0 : i32, i32
  }
  func.func @transform_4(%arg0: i32) -> (i32, i32, i32) {
    %c0_i32 = arith.constant 0 : i32
    %c0_i32_0 = arith.constant 0 : i32
    %c0_i32_1 = arith.constant 0 : i32
    %c0_i32_2 = arith.constant 0 : i32
    return %c0_i32, %c0_i32_0, %c0_i32_1 : i32, i32, i32
  }
  func.func @transform_5(%arg0: i32) -> (i32, i32) {
    %c0_i32 = arith.constant 0 : i32
    %c0_i32_0 = arith.constant 0 : i32
    %c0_i32_1 = arith.constant 0 : i32
    return %c0_i32, %c0_i32_0 : i32, i32
  }
  func.func @transform_6(%arg0: i32) -> (i32, i32) {
    %c0_i32 = arith.constant 0 : i32
    %c0_i32_0 = arith.constant 0 : i32
    %c0_i32_1 = arith.constant 0 : i32
    return %c0_i32, %c0_i32_0 : i32, i32
  }
  func.func @transform_7(%arg0: i32) -> (i32, i32) {
    %c0_i32 = arith.constant 0 : i32
    %c0_i32_0 = arith.constant 0 : i32
    return %arg0, %c0_i32 : i32, i32
  }
}

</mosaic_0001>

<llo_original>
// kernel: tpu_custom_call.1
$region0: #{tpu_custom_call.1}
  #allocation0 [shape = 'u32[]', space=smem, size = 0x4, offset = 0x4, fixed_abs, tag = 'smem constant byte address 0x4 - core index']
  #allocation1 [shape = 'u32[144,128]{1,0:T(1,128)}', space=vmem, size = 0x12000, scoped, tag = 'internal scratch']
  %s0 = inlined_call_operand.hbm [shape: f32[256,512], index: 0, kind: input, shape index: {}]
  %s1 = inlined_call_operand.hbm [shape: f32[256,768], index: 1, kind: input, shape index: {}]
  %s2 = inlined_call_operand.hbm [shape: bf16[512,128], index: 2, kind: input, shape index: {}]
  %s3 = inlined_call_operand.hbm [shape: bf16[768,128], index: 3, kind: input, shape index: {}]
  %s4 = inlined_call_operand.hbm [shape: bf16[2,128,128], index: 4, kind: input, shape index: {}]
  %s5 = inlined_call_operand.hbm [shape: bf16[128,128], index: 5, kind: input, shape index: {}]
  %s6 = inlined_call_operand.vmem [shape: f32[4,128], index: 6, kind: input, shape index: {}]
  %s7 = inlined_call_operand.hbm [shape: f32[256,128], index: 7, kind: output, shape index: {}]
  %s8 = sld [smem:[#allocation0]]
  $region85: #{tpu_custom_call.1} parent=0
    _
  %s10 = ssub.s32 1, %s8
  %s11 = scalar_select 0, %s10, %s8
  $region1: #{tpu_custom_call.1} parent=0
    #allocation2 [shape = 'u8[524288]{0}', space=vmem, size = 0x80000, scoped, tag = 'input window, operand 0']
    #allocation3 [shape = 's32[2]{0}', space=sflag, size = 0x8, scoped, tag = 'scoped memory for tpu_custom_call.1']
    #allocation4 [shape = 's32[2]{0}', space=sflag, size = 0x8, scoped, tag = 'scoped memory for tpu_custom_call.1']
    #allocation5 [shape = 'u8[786432]{0}', space=vmem, size = 0xc0000, scoped, tag = 'input window, operand 1']
    #allocation6 [shape = 's32[2]{0}', space=sflag, size = 0x8, scoped, tag = 'scoped memory for tpu_custom_call.1']
    #allocation7 [shape = 'u8[131072]{0}', space=vmem, size = 0x20000, scoped, tag = 'input window, operand 2, single buffered']
    #allocation8 [shape = 'u8[196608]{0}', space=vmem, size = 0x30000, scoped, tag = 'input window, operand 3, single buffered']
    #allocation9 [shape = 's32[1]{0}', space=sflag, size = 0x4, scoped, tag = 'scoped memory for tpu_custom_call.1']
    #allocation10 [shape = 'u8[65536]{0}', space=vmem, size = 0x10000, scoped, tag = 'input window, operand 4, single buffered']
    #allocation11 [shape = 'u8[32768]{0}', space=vmem, size = 0x8000, scoped, tag = 'input window, operand 5, single buffered']
    #allocation12 [shape = 's32[1]{0}', space=sflag, size = 0x4, scoped, tag = 'scoped memory for tpu_custom_call.1']
    #allocation13 [shape = 'u8[131072]{0}', space=vmem, size = 0x20000, scoped, tag = 'output window, operand 0']
    %12 = vsyncpa [#allocation3], 0
    %s13 = scalar_lea.sflag [#allocation3], 1
    %14 = vsyncpa %s13, 0
    %15 = vsyncpa [#allocation6], 0
    %s16 = scalar_lea.sflag [#allocation6], 1
    %17 = vsyncpa %s16, 0
    %18 = vsyncpa [#allocation9], 0
    %19 = vsyncpa [#allocation12], 0
    %20 = vsyncpa [#allocation4], 0
    %s21 = scalar_lea.sflag [#allocation4], 1
    %22 = vsyncpa %s21, 0
    loop: start=0, step=1, limit=4
    $region2: #{tpu_custom_call.1} parent=1 // loop_pre_header
      _
    $region3: #{tpu_custom_call.1} parent=1 // loop_header
      %s24 = sphi 0, %s28
      %p25 = scmp.ge.s32.totalorder %s24, 4
      %s34 = sphi 0, %s36
      %s37 = sphi 0, %s34
      %s38 = sphi 0, %s37
      %s54 = sphi 0, %s38
      %s60 = sphi 0, %s62
      %s63 = sphi 0, %s60
      %s64 = sphi 0, %s63
      %s80 = sphi 0, %s64
      %s84 = sphi 0, %s84
      %s86 = sphi 0, %s84
      %s87 = sphi 0, %s86
      %s101 = sphi 0, %s87
      %s105 = sphi 0, %s105
      %s107 = sphi 0, %s105
      %s108 = sphi 0, %s107
      %s122 = sphi 0, %s108
      %s126 = sphi 0, %s126
      %s128 = sphi 0, %s126
      %s129 = sphi 0, %s128
      %s143 = sphi 0, %s129
      %s147 = sphi 0, %s147
      %s149 = sphi 0, %s147
      %s150 = sphi 0, %s149
      %s164 = sphi 0, %s150
      %s168 = sphi 0, %s168
      %s170 = sphi 0, %s168
      %s171 = sphi 0, %s170
      %s185 = sphi 0, %s171
      %s191 = sphi 0, %s193
      %s194 = sphi 0, %s191
      %s195 = sphi 0, %s194
      %s211 = sphi 0, %s195
    $region4: #{tpu_custom_call.1} parent=1 // loop_header_branch
      %27 = sbr.rel (%p25) target = $region8
    $region5: #{tpu_custom_call.1} parent=1 // loop_body
      %s29 = ssub.s32 %s24, 1
      %s30 = ssub.s32 %s24, 2
      %s31 = sadd.s32 %s24, 1
      %s32 = ssub.s32 %s24, %s31
      %p33 = scmp.eq.s32.totalorder %s32, 0
      %s35 = sadd.s32 %s34, 1
      %s36 = scalar_select %p33, %s34, %s35
      %p39 = pneg %p33
      %p40 = scmp.eq.s32.totalorder %s24, 1
      %p41 = por %p39, %p40
      %p42 = scmp.ne.s32.totalorder %s34, %s37
      %p43 = scmp.eq.s32.totalorder %s24, 0
      %p44 = por %p42, %p43
      %p45 = scmp.ne.s32.totalorder %s34, %s37
      %p46 = scmp.eq.s32.totalorder %s29, 1
      %p47 = por %p45, %p46
      %p48 = scmp.ne.s32.totalorder %s37, %s38
      %p49 = scmp.eq.s32.totalorder %s29, 0
      %p50 = por %p48, %p49
      %p51 = scmp.ne.s32.totalorder %s37, %s38
      %p52 = scmp.eq.s32.totalorder %s30, 1
      %p53 = por %p51, %p52
      %p55 = scmp.ne.s32.totalorder %s38, %s54
      %p56 = scmp.eq.s32.totalorder %s30, 0
      %p57 = por %p55, %p56
      %s58 = ssub.s32 %s24, %s31
      %p59 = scmp.eq.s32.totalorder %s58, 0
      %s61 = sadd.s32 %s60, 1
      %s62 = scalar_select %p59, %s60, %s61
      %p65 = pneg %p59
      %p66 = scmp.eq.s32.totalorder %s24, 1
      %p67 = por %p65, %p66
      %p68 = scmp.ne.s32.totalorder %s60, %s63
      %p69 = scmp.eq.s32.totalorder %s24, 0
      %p70 = por %p68, %p69
      %p71 = scmp.ne.s32.totalorder %s60, %s63
      %p72 = scmp.eq.s32.totalorder %s29, 1
      %p73 = por %p71, %p72
      %p74 = scmp.ne.s32.totalorder %s63, %s64
      %p75 = scmp.eq.s32.totalorder %s29, 0
      %p76 = por %p74, %p75
      %p77 = scmp.ne.s32.totalorder %s63, %s64
      %p78 = scmp.eq.s32.totalorder %s30, 1
      %p79 = por %p77, %p78
      %p81 = scmp.ne.s32.totalorder %s64, %s80
      %p82 = scmp.eq.s32.totalorder %s30, 0
      %p83 = por %p81, %p82
      %s85 = sadd.s32 %s84, 1
      %p88 = scmp.eq.s32.totalorder %s24, 1
      %p89 = scmp.ne.s32.totalorder %s84, %s86
      %p90 = scmp.eq.s32.totalorder %s24, 0
      %p91 = por %p89, %p90
      %p92 = scmp.ne.s32.totalorder %s84, %s86
      %p93 = scmp.eq.s32.totalorder %s29, 1
      %p94 = por %p92, %p93
      %p95 = scmp.ne.s32.totalorder %s86, %s87
      %p96 = scmp.eq.s32.totalorder %s29, 0
      %p97 = por %p95, %p96
      %p98 = scmp.ne.s32.totalorder %s86, %s87
      %p99 = scmp.eq.s32.totalorder %s30, 1
      %p100 = por %p98, %p99
      %p102 = scmp.ne.s32.totalorder %s87, %s101
      %p103 = scmp.eq.s32.totalorder %s30, 0
      %p104 = por %p102, %p103
      %s106 = sadd.s32 %s105, 1
      %p109 = scmp.eq.s32.totalorder %s24, 1
      %p110 = scmp.ne.s32.totalorder %s105, %s107
      %p111 = scmp.eq.s32.totalorder %s24, 0
      %p112 = por %p110, %p111
      %p113 = scmp.ne.s32.totalorder %s105, %s107
      %p114 = scmp.eq.s32.totalorder %s29, 1
      %p115 = por %p113, %p114
      %p116 = scmp.ne.s32.totalorder %s107, %s108
      %p117 = scmp.eq.s32.totalorder %s29, 0
      %p118 = por %p116, %p117
      %p119 = scmp.ne.s32.totalorder %s107, %s108
      %p120 = scmp.eq.s32.totalorder %s30, 1
      %p121 = por %p119, %p120
      %p123 = scmp.ne.s32.totalorder %s108, %s122
      %p124 = scmp.eq.s32.totalorder %s30, 0
      %p125 = por %p123, %p124
      %s127 = sadd.s32 %s126, 1
      %p130 = scmp.eq.s32.totalorder %s24, 1
      %p131 = scmp.ne.s32.totalorder %s126, %s128
      %p132 = scmp.eq.s32.totalorder %s24, 0
      %p133 = por %p131, %p132
      %p134 = scmp.ne.s32.totalorder %s126, %s128
      %p135 = scmp.eq.s32.totalorder %s29, 1
      %p136 = por %p134, %p135
      %p137 = scmp.ne.s32.totalorder %s128, %s129
      %p138 = scmp.eq.s32.totalorder %s29, 0
      %p139 = por %p137, %p138
      %p140 = scmp.ne.s32.totalorder %s128, %s129
      %p141 = scmp.eq.s32.totalorder %s30, 1
      %p142 = por %p140, %p141
      %p144 = scmp.ne.s32.totalorder %s129, %s143
      %p145 = scmp.eq.s32.totalorder %s30, 0
      %p146 = por %p144, %p145
      %s148 = sadd.s32 %s147, 1
      %p151 = scmp.eq.s32.totalorder %s24, 1
      %p152 = scmp.ne.s32.totalorder %s147, %s149
      %p153 = scmp.eq.s32.totalorder %s24, 0
      %p154 = por %p152, %p153
      %p155 = scmp.ne.s32.totalorder %s147, %s149
      %p156 = scmp.eq.s32.totalorder %s29, 1
      %p157 = por %p155, %p156
      %p158 = scmp.ne.s32.totalorder %s149, %s150
      %p159 = scmp.eq.s32.totalorder %s29, 0
      %p160 = por %p158, %p159
      %p161 = scmp.ne.s32.totalorder %s149, %s150
      %p162 = scmp.eq.s32.totalorder %s30, 1
      %p163 = por %p161, %p162
      %p165 = scmp.ne.s32.totalorder %s150, %s164
      %p166 = scmp.eq.s32.totalorder %s30, 0
      %p167 = por %p165, %p166
      %s169 = sadd.s32 %s168, 1
      %p172 = scmp.eq.s32.totalorder %s24, 1
      %p173 = scmp.ne.s32.totalorder %s168, %s170
      %p174 = scmp.eq.s32.totalorder %s24, 0
      %p175 = por %p173, %p174
      %p176 = scmp.ne.s32.totalorder %s168, %s170
      %p177 = scmp.eq.s32.totalorder %s29, 1
      %p178 = por %p176, %p177
      %p179 = scmp.ne.s32.totalorder %s170, %s171
      %p180 = scmp.eq.s32.totalorder %s29, 0
      %p181 = por %p179, %p180
      %p182 = scmp.ne.s32.totalorder %s170, %s171
      %p183 = scmp.eq.s32.totalorder %s30, 1
      %p184 = por %p182, %p183
      %p186 = scmp.ne.s32.totalorder %s171, %s185
      %p187 = scmp.eq.s32.totalorder %s30, 0
      %p188 = por %p186, %p187
      %s189 = ssub.s32 %s24, %s31
      %p190 = scmp.eq.s32.totalorder %s189, 0
      %s192 = sadd.s32 %s191, 1
      %s193 = scalar_select %p190, %s191, %s192
      %p196 = pneg %p190
      %p197 = scmp.eq.s32.totalorder %s24, 1
      %p198 = por %p196, %p197
      %p199 = scmp.ne.s32.totalorder %s191, %s194
      %p200 = scmp.eq.s32.totalorder %s24, 0
      %p201 = por %p199, %p200
      %p202 = scmp.ne.s32.totalorder %s191, %s194
      %p203 = scmp.eq.s32.totalorder %s29, 1
      %p204 = por %p202, %p203
      %p205 = scmp.ne.s32.totalorder %s194, %s195
      %p206 = scmp.eq.s32.totalorder %s29, 0
      %p207 = por %p205, %p206
      %p208 = scmp.ne.s32.totalorder %s194, %s195
      %p209 = scmp.eq.s32.totalorder %s30, 1
      %p210 = por %p208, %p209
      %p212 = scmp.ne.s32.totalorder %s195, %s211
      %p213 = scmp.eq.s32.totalorder %s30, 0
      %p214 = por %p212, %p213
      %p215 = scmp.le.s32.totalorder 1, %s24
      %p216 = scmp.lt.s32.totalorder %s24, 3
      %p217 = pnand %p215, %p216
      %p218 = pneg %p217
      // Predicated region
      $region9: #{tpu_custom_call.1} parent=5 // pred_check
        _
      $region10: #{tpu_custom_call.1} parent=5 // pred_check_branch
        %220 = sbr.rel (%p217) target = $region12
      $region11: #{tpu_custom_call.1} parent=5 // pred_region
        %s221 = ssub.s32 %s24, 1
        // Predicated region
        $region13: #{tpu_custom_call.1} parent=11 // pred_check
          %p222 = pneg %p97
        $region14: #{tpu_custom_call.1} parent=11 // pred_check_branch
          %224 = sbr.rel (%p222) target = $region16
        $region15: #{tpu_custom_call.1} parent=11 // pred_region
          %s226 = ssub.s32 4096, 4096
          %227 = vsyncadd [#allocation6], %s226
          %s228 = sshll.u32 [#allocation7], 4
          %s229 = int_to_ptr.vmem [resolvable:$true] %s228
          %234 = dma.hbm_to_vmem [thread:$0]  %s2, 4096, %s229, [#allocation6], 64, 64, 4
        $region16: #{tpu_custom_call.1} parent=11 // pred_fallthru
          _
        // Predicated region
        $region17: #{tpu_custom_call.1} parent=11 // pred_check
          %p235 = pneg %p118
        $region18: #{tpu_custom_call.1} parent=11 // pred_check_branch
          %237 = sbr.rel (%p235) target = $region20
        $region19: #{tpu_custom_call.1} parent=11 // pred_region
          %s239 = ssub.s32 6144, 6144
          %240 = vsyncadd [#allocation9], %s239
          %s241 = sshll.u32 [#allocation8], 4
          %s242 = int_to_ptr.vmem [resolvable:$true] %s241
          %247 = dma.hbm_to_vmem [thread:$0]  %s3, 6144, %s242, [#allocation9], 64, 64, 4
        $region20: #{tpu_custom_call.1} parent=11 // pred_fallthru
          _
        // Predicated region
        $region21: #{tpu_custom_call.1} parent=11 // pred_check
          %p248 = pneg %p139
        $region22: #{tpu_custom_call.1} parent=11 // pred_check_branch
          %250 = sbr.rel (%p248) target = $region24
        $region23: #{tpu_custom_call.1} parent=11 // pred_region
          %s252 = ssub.s32 2048, 2048
          %253 = vsyncadd [#allocation9], %s252
          %s254 = sshll.u32 [#allocation10], 4
          %s255 = int_to_ptr.vmem [resolvable:$true] %s254
          %260 = dma.hbm_to_vmem [thread:$0]  %s4, 2048, %s255, [#allocation9], 64, 64, 4
        $region24: #{tpu_custom_call.1} parent=11 // pred_fallthru
          _
        // Predicated region
        $region25: #{tpu_custom_call.1} parent=11 // pred_check
          %p261 = pneg %p160
        $region26: #{tpu_custom_call.1} parent=11 // pred_check_branch
          %263 = sbr.rel (%p261) target = $region28
        $region27: #{tpu_custom_call.1} parent=11 // pred_region
          %s265 = ssub.s32 1024, 1024
          %266 = vsyncadd [#allocation12], %s265
          %s267 = sshll.u32 [#allocation11], 4
          %s268 = int_to_ptr.vmem [resolvable:$true] %s267
          %273 = dma.hbm_to_vmem [thread:$0]  %s5, 1024, %s268, [#allocation12], 64, 64, 4
        $region28: #{tpu_custom_call.1} parent=11 // pred_fallthru
          _
        // Predicated region
        $region29: #{tpu_custom_call.1} parent=11 // pred_check
          %p274 = pneg %p181
        $region30: #{tpu_custom_call.1} parent=11 // pred_check_branch
          %276 = sbr.rel (%p274) target = $region32
        $region31: #{tpu_custom_call.1} parent=11 // pred_region
          _
        $region32: #{tpu_custom_call.1} parent=11 // pred_fallthru
          _
      $region12: #{tpu_custom_call.1} parent=5 // pred_fallthru
        _
      %p277 = scmp.lt.s32.totalorder %s24, 2
      // Predicated region
      $region33: #{tpu_custom_call.1} parent=5 // pred_check
        %p278 = pneg %p277
      $region34: #{tpu_custom_call.1} parent=5 // pred_check_branch
        %280 = sbr.rel (%p278) target = $region36
      $region35: #{tpu_custom_call.1} parent=5 // pred_region
        // Predicated region
        $region37: #{tpu_custom_call.1} parent=35 // pred_check
          %p281 = pneg %p44
        $region38: #{tpu_custom_call.1} parent=35 // pred_check_branch
          %283 = sbr.rel (%p281) target = $region40
        $region39: #{tpu_custom_call.1} parent=35 // pred_region
          %s284 = sand.u32 %s34, 1
          %s285 = scalar_lea.sflag [#allocation3], %s284
          %s286 = sand.u32 %s34, 1
          %s287 = smul.addr %s286, 512
          %s288 = scalar_lea.vmem [#allocation2], %s287
          %s289 = smul.u32 16, %s24
          %s291 = ssub.s32 8192, 8192
          %292 = vsyncadd %s285, %s291
          %s293 = smul.addr %s289, 4
          %s294 = smul.addr %s293, 128
          %s295 = scalar_lea.hbm %s0, %s294
          %s296 = sshll.u32 %s288, 4
          %s297 = int_to_ptr.vmem [resolvable:$true] %s296
          %302 = dma.hbm_to_vmem [thread:$0]  %s295, 8192, %s297, %s285, 512, 512, 32
        $region40: #{tpu_custom_call.1} parent=35 // pred_fallthru
          _
        // Predicated region
        $region41: #{tpu_custom_call.1} parent=35 // pred_check
          %p303 = pneg %p70
        $region42: #{tpu_custom_call.1} parent=35 // pred_check_branch
          %305 = sbr.rel (%p303) target = $region44
        $region43: #{tpu_custom_call.1} parent=35 // pred_region
          %s306 = sand.u32 %s24, 1
          %s307 = scalar_lea.sflag [#allocation6], %s306
          %s308 = sand.u32 %s60, 1
          %s309 = smul.addr %s308, 768
          %s310 = scalar_lea.vmem [#allocation5], %s309
          %s311 = smul.u32 16, %s24
          %s313 = ssub.s32 12288, 12288
          %314 = vsyncadd %s307, %s313
          %s315 = smul.addr %s311, 6
          %s316 = smul.addr %s315, 128
          %s317 = scalar_lea.hbm %s1, %s316
          %s318 = sshll.u32 %s310, 4
          %s319 = int_to_ptr.vmem [resolvable:$true] %s318
          %324 = dma.hbm_to_vmem [thread:$0]  %s317, 12288, %s319, %s307, 768, 768, 48
        $region44: #{tpu_custom_call.1} parent=35 // pred_fallthru
          _
      $region36: #{tpu_custom_call.1} parent=5 // pred_fallthru
        _
      %p325 = scmp.le.s32.totalorder 1, %s24
      %p326 = scmp.lt.s32.totalorder %s24, 3
      %p327 = pnand %p325, %p326
      %p328 = pneg %p327
      // Predicated region
      $region45: #{tpu_custom_call.1} parent=5 // pred_check
        _
      $region46: #{tpu_custom_call.1} parent=5 // pred_check_branch
        %330 = sbr.rel (%p327) target = $region48
      $region47: #{tpu_custom_call.1} parent=5 // pred_region
        %s331 = ssub.s32 %s24, 1
        %s332 = sand.u32 %s37, 1
        %s333 = scalar_lea.sflag [#allocation3], %s332
        %s334 = sand.u32 %s37, 1
        %s335 = smul.addr %s334, 512
        %s336 = scalar_lea.vmem [#allocation2], %s335
        // Predicated region
        $region49: #{tpu_custom_call.1} parent=47 // pred_check
          %p337 = pneg %p50
        $region50: #{tpu_custom_call.1} parent=47 // pred_check_branch
          %339 = sbr.rel (%p337) target = $region52
        $region51: #{tpu_custom_call.1} parent=47 // pred_region
          %340 = dma.done %s333, 8192
        $region52: #{tpu_custom_call.1} parent=47 // pred_fallthru
          _
        %s341 = sand.u32 %s29, 1
        %s342 = scalar_lea.sflag [#allocation6], %s341
        %s343 = sand.u32 %s63, 1
        %s344 = smul.addr %s343, 768
        %s345 = scalar_lea.vmem [#allocation5], %s344
        // Predicated region
        $region53: #{tpu_custom_call.1} parent=47 // pred_check
          %p346 = pneg %p76
        $region54: #{tpu_custom_call.1} parent=47 // pred_check_branch
          %348 = sbr.rel (%p346) target = $region56
        $region55: #{tpu_custom_call.1} parent=47 // pred_region
          %349 = dma.done %s342, 12288
        $region56: #{tpu_custom_call.1} parent=47 // pred_fallthru
          _
        // Predicated region
        $region57: #{tpu_custom_call.1} parent=47 // pred_check
          %p350 = pneg %p97
        $region58: #{tpu_custom_call.1} parent=47 // pred_check_branch
          %352 = sbr.rel (%p350) target = $region60
        $region59: #{tpu_custom_call.1} parent=47 // pred_region
          %353 = dma.done [#allocation6], 4096
        $region60: #{tpu_custom_call.1} parent=47 // pred_fallthru
          _
        // Predicated region
        $region61: #{tpu_custom_call.1} parent=47 // pred_check
          %p354 = pneg %p118
        $region62: #{tpu_custom_call.1} parent=47 // pred_check_branch
          %356 = sbr.rel (%p354) target = $region64
        $region63: #{tpu_custom_call.1} parent=47 // pred_region
          %357 = dma.done [#allocation9], 6144
        $region64: #{tpu_custom_call.1} parent=47 // pred_fallthru
          _
        // Predicated region
        $region65: #{tpu_custom_call.1} parent=47 // pred_check
          %p358 = pneg %p139
        $region66: #{tpu_custom_call.1} parent=47 // pred_check_branch
          %360 = sbr.rel (%p358) target = $region68
        $region67: #{tpu_custom_call.1} parent=47 // pred_region
          %361 = dma.done [#allocation9], 2048
        $region68: #{tpu_custom_call.1} parent=47 // pred_fallthru
          _
        // Predicated region
        $region69: #{tpu_custom_call.1} parent=47 // pred_check
          %p362 = pneg %p160
        $region70: #{tpu_custom_call.1} parent=47 // pred_check_branch
          %364 = sbr.rel (%p362) target = $region72
        $region71: #{tpu_custom_call.1} parent=47 // pred_region
          %365 = dma.done [#allocation12], 1024
        $region72: #{tpu_custom_call.1} parent=47 // pred_fallthru
          _
        %s366 = sand.u32 %s37, 1
        %s367 = scalar_lea.sflag [#allocation3], %s366
        %s368 = sand.u32 %s37, 1
        %s369 = smul.addr %s368, 512
        %s370 = scalar_lea.vmem [#allocation2], %s369
        %p371 = pneg %p50
        %p372 = pneg %p47
        %s373 = sand.u32 %s29, 1
        %s374 = scalar_lea.sflag [#allocation6], %s373
        %s375 = sand.u32 %s63, 1
        %s376 = smul.addr %s375, 768
        %s377 = scalar_lea.vmem [#allocation5], %s376
        %p378 = pneg %p76
        %p379 = pneg %p73
        %p380 = pneg %p97
        %p381 = pneg %p94
        %p382 = pneg %p118
        %p383 = pneg %p115
        %p384 = pneg %p139
        %p385 = pneg %p136
        %p386 = pneg %p160
        %p387 = pneg %p157
        %p388 = pneg %p181
        %p389 = pneg %p178
        %p390 = pneg %p207
        %p391 = pneg %p204
        %s392 = sand.u32 %s194, 1
        %s393 = scalar_lea.sflag [#allocation4], %s392
        %s394 = sand.u32 %s194, 1
        %s395 = smul.addr %s394, 128
        %s396 = scalar_lea.vmem [#allocation13], %s395
        %s397 = smul.u32 16, %s29
        %s398 = smul.u32 16, %s29
        %s399 = smul.u32 16, %s29
        %v401 = vld [vmem:[%s336] sm:$0xff]
        %v402 = vld [vmem:[%s336 + $0x8] sm:$0xff]
        %v403 = vld [vmem:[%s336 + $0x10] sm:$0xff]
        %v404 = vld [vmem:[%s336 + $0x18] sm:$0xff]
        %v405 = vld [vmem:[%s336 + $0x20] sm:$0xff]
        %v406 = vld [vmem:[%s336 + $0x28] sm:$0xff]
        %v407 = vld [vmem:[%s336 + $0x30] sm:$0xff]
        %v408 = vld [vmem:[%s336 + $0x38] sm:$0xff]
        %v409 = vld [vmem:[%s336 + $0x40] sm:$0xff]
        %v410 = vld [vmem:[%s336 + $0x48] sm:$0xff]
        %v411 = vld [vmem:[%s336 + $0x50] sm:$0xff]
        %v412 = vld [vmem:[%s336 + $0x58] sm:$0xff]
        %v413 = vld [vmem:[%s336 + $0x60] sm:$0xff]
        %v414 = vld [vmem:[%s336 + $0x68] sm:$0xff]
        %v415 = vld [vmem:[%s336 + $0x70] sm:$0xff]
        %v416 = vld [vmem:[%s336 + $0x78] sm:$0xff]
        %v417 = vld [vmem:[%s336 + $0x80] sm:$0xff]
        %v418 = vld [vmem:[%s336 + $0x88] sm:$0xff]
        %v419 = vld [vmem:[%s336 + $0x90] sm:$0xff]
        %v420 = vld [vmem:[%s336 + $0x98] sm:$0xff]
        %v421 = vld [vmem:[%s336 + $0xa0] sm:$0xff]
        %v422 = vld [vmem:[%s336 + $0xa8] sm:$0xff]
        %v423 = vld [vmem:[%s336 + $0xb0] sm:$0xff]
        %v424 = vld [vmem:[%s336 + $0xb8] sm:$0xff]
        %v425 = vld [vmem:[%s336 + $0xc0] sm:$0xff]
        %v426 = vld [vmem:[%s336 + $0xc8] sm:$0xff]
        %v427 = vld [vmem:[%s336 + $0xd0] sm:$0xff]
        %v428 = vld [vmem:[%s336 + $0xd8] sm:$0xff]
        %v429 = vld [vmem:[%s336 + $0xe0] sm:$0xff]
        %v430 = vld [vmem:[%s336 + $0xe8] sm:$0xff]
        %v431 = vld [vmem:[%s336 + $0xf0] sm:$0xff]
        %v432 = vld [vmem:[%s336 + $0xf8] sm:$0xff]
        %v433 = vld [vmem:[%s336 + $0x100] sm:$0xff]
        %v434 = vld [vmem:[%s336 + $0x108] sm:$0xff]
        %v435 = vld [vmem:[%s336 + $0x110] sm:$0xff]
        %v436 = vld [vmem:[%s336 + $0x118] sm:$0xff]
        %v437 = vld [vmem:[%s336 + $0x120] sm:$0xff]
        %v438 = vld [vmem:[%s336 + $0x128] sm:$0xff]
        %v439 = vld [vmem:[%s336 + $0x130] sm:$0xff]
        %v440 = vld [vmem:[%s336 + $0x138] sm:$0xff]
        %v441 = vld [vmem:[%s336 + $0x140] sm:$0xff]
        %v442 = vld [vmem:[%s336 + $0x148] sm:$0xff]
        %v443 = vld [vmem:[%s336 + $0x150] sm:$0xff]
        %v444 = vld [vmem:[%s336 + $0x158] sm:$0xff]
        %v445 = vld [vmem:[%s336 + $0x160] sm:$0xff]
        %v446 = vld [vmem:[%s336 + $0x168] sm:$0xff]
        %v447 = vld [vmem:[%s336 + $0x170] sm:$0xff]
        %v448 = vld [vmem:[%s336 + $0x178] sm:$0xff]
        %v449 = vld [vmem:[%s336 + $0x180] sm:$0xff]
        %v450 = vld [vmem:[%s336 + $0x188] sm:$0xff]
        %v451 = vld [vmem:[%s336 + $0x190] sm:$0xff]
        %v452 = vld [vmem:[%s336 + $0x198] sm:$0xff]
        %v453 = vld [vmem:[%s336 + $0x1a0] sm:$0xff]
        %v454 = vld [vmem:[%s336 + $0x1a8] sm:$0xff]
        %v455 = vld [vmem:[%s336 + $0x1b0] sm:$0xff]
        %v456 = vld [vmem:[%s336 + $0x1b8] sm:$0xff]
        %v457 = vld [vmem:[%s336 + $0x1c0] sm:$0xff]
        %v458 = vld [vmem:[%s336 + $0x1c8] sm:$0xff]
        %v459 = vld [vmem:[%s336 + $0x1d0] sm:$0xff]
        %v460 = vld [vmem:[%s336 + $0x1d8] sm:$0xff]
        %v461 = vld [vmem:[%s336 + $0x1e0] sm:$0xff]
        %v462 = vld [vmem:[%s336 + $0x1e8] sm:$0xff]
        %v463 = vld [vmem:[%s336 + $0x1f0] sm:$0xff]
        %v464 = vld [vmem:[%s336 + $0x1f8] sm:$0xff]
        %v465 = vpack.c.bf16 %v405, %v401
        %v466 = vpack.c.bf16 %v406, %v402
        %v467 = vpack.c.bf16 %v407, %v403
        %v468 = vpack.c.bf16 %v408, %v404
        %v469 = vpack.c.bf16 %v413, %v409
        %v470 = vpack.c.bf16 %v414, %v410
        %v471 = vpack.c.bf16 %v415, %v411
        %v472 = vpack.c.bf16 %v416, %v412
        %v473 = vpack.c.bf16 %v421, %v417
        %v474 = vpack.c.bf16 %v422, %v418
        %v475 = vpack.c.bf16 %v423, %v419
        %v476 = vpack.c.bf16 %v424, %v420
        %v477 = vpack.c.bf16 %v429, %v425
        %v478 = vpack.c.bf16 %v430, %v426
        %v479 = vpack.c.bf16 %v431, %v427
        %v480 = vpack.c.bf16 %v432, %v428
        %v481 = vpack.c.bf16 %v437, %v433
        %v482 = vpack.c.bf16 %v438, %v434
        %v483 = vpack.c.bf16 %v439, %v435
        %v484 = vpack.c.bf16 %v440, %v436
        %v485 = vpack.c.bf16 %v445, %v441
        %v486 = vpack.c.bf16 %v446, %v442
        %v487 = vpack.c.bf16 %v447, %v443
        %v488 = vpack.c.bf16 %v448, %v444
        %v489 = vpack.c.bf16 %v453, %v449
        %v490 = vpack.c.bf16 %v454, %v450
        %v491 = vpack.c.bf16 %v455, %v451
        %v492 = vpack.c.bf16 %v456, %v452
        %v493 = vpack.c.bf16 %v461, %v457
        %v494 = vpack.c.bf16 %v462, %v458
        %v495 = vpack.c.bf16 %v463, %v459
        %v496 = vpack.c.bf16 %v464, %v460
        %v497 = vld [vmem:[#allocation7] sm:$0xf]
        %v498 = vld [vmem:[#allocation7 + $0x4] sm:$0xf]
        %v499 = vld [vmem:[#allocation7 + $0x8] sm:$0xf]
        %v500 = vld [vmem:[#allocation7 + $0xc] sm:$0xf]
        %v501 = vld [vmem:[#allocation7 + $0x10] sm:$0xf]
        %v502 = vld [vmem:[#allocation7 + $0x14] sm:$0xf]
        %v503 = vld [vmem:[#allocation7 + $0x18] sm:$0xf]
        %v504 = vld [vmem:[#allocation7 + $0x1c] sm:$0xf]
        %v505 = vld [vmem:[#allocation7 + $0x20] sm:$0xf]
        %v506 = vld [vmem:[#allocation7 + $0x24] sm:$0xf]
        %v507 = vld [vmem:[#allocation7 + $0x28] sm:$0xf]
        %v508 = vld [vmem:[#allocation7 + $0x2c] sm:$0xf]
        %v509 = vld [vmem:[#allocation7 + $0x30] sm:$0xf]
        %v510 = vld [vmem:[#allocation7 + $0x34] sm:$0xf]
        %v511 = vld [vmem:[#allocation7 + $0x38] sm:$0xf]
        %v512 = vld [vmem:[#allocation7 + $0x3c] sm:$0xf]
        %v513 = vld [vmem:[#allocation7 + $0x40] sm:$0xf]
        %v514 = vld [vmem:[#allocation7 + $0x44] sm:$0xf]
        %v515 = vld [vmem:[#allocation7 + $0x48] sm:$0xf]
        %v516 = vld [vmem:[#allocation7 + $0x4c] sm:$0xf]
        %v517 = vld [vmem:[#allocation7 + $0x50] sm:$0xf]
        %v518 = vld [vmem:[#allocation7 + $0x54] sm:$0xf]
        %v519 = vld [vmem:[#allocation7 + $0x58] sm:$0xf]
        %v520 = vld [vmem:[#allocation7 + $0x5c] sm:$0xf]
        %v521 = vld [vmem:[#allocation7 + $0x60] sm:$0xf]
        %v522 = vld [vmem:[#allocation7 + $0x64] sm:$0xf]
        %v523 = vld [vmem:[#allocation7 + $0x68] sm:$0xf]
        %v524 = vld [vmem:[#allocation7 + $0x6c] sm:$0xf]
        %v525 = vld [vmem:[#allocation7 + $0x70] sm:$0xf]
        %v526 = vld [vmem:[#allocation7 + $0x74] sm:$0xf]
        %v527 = vld [vmem:[#allocation7 + $0x78] sm:$0xf]
        %v528 = vld [vmem:[#allocation7 + $0x7c] sm:$0xf]
        %v529 = vld [vmem:[#allocation7 + $0x80] sm:$0xf]
        %v530 = vld [vmem:[#allocation7 + $0x84] sm:$0xf]
        %v531 = vld [vmem:[#allocation7 + $0x88] sm:$0xf]
        %v532 = vld [vmem:[#allocation7 + $0x8c] sm:$0xf]
        %v533 = vld [vmem:[#allocation7 + $0x90] sm:$0xf]
        %v534 = vld [vmem:[#allocation7 + $0x94] sm:$0xf]
        %v535 = vld [vmem:[#allocation7 + $0x98] sm:$0xf]
        %v536 = vld [vmem:[#allocation7 + $0x9c] sm:$0xf]
        %v537 = vld [vmem:[#allocation7 + $0xa0] sm:$0xf]
        %v538 = vld [vmem:[#allocation7 + $0xa4] sm:$0xf]
        %v539 = vld [vmem:[#allocation7 + $0xa8] sm:$0xf]
        %v540 = vld [vmem:[#allocation7 + $0xac] sm:$0xf]
        %v541 = vld [vmem:[#allocation7 + $0xb0] sm:$0xf]
        %v542 = vld [vmem:[#allocation7 + $0xb4] sm:$0xf]
        %v543 = vld [vmem:[#allocation7 + $0xb8] sm:$0xf]
        %v544 = vld [vmem:[#allocation7 + $0xbc] sm:$0xf]
        %v545 = vld [vmem:[#allocation7 + $0xc0] sm:$0xf]
        %v546 = vld [vmem:[#allocation7 + $0xc4] sm:$0xf]
        %v547 = vld [vmem:[#allocation7 + $0xc8] sm:$0xf]
        %v548 = vld [vmem:[#allocation7 + $0xcc] sm:$0xf]
        %v549 = vld [vmem:[#allocation7 + $0xd0] sm:$0xf]
        %v550 = vld [vmem:[#allocation7 + $0xd4] sm:$0xf]
        %v551 = vld [vmem:[#allocation7 + $0xd8] sm:$0xf]
        %v552 = vld [vmem:[#allocation7 + $0xdc] sm:$0xf]
        %v553 = vld [vmem:[#allocation7 + $0xe0] sm:$0xf]
        %v554 = vld [vmem:[#allocation7 + $0xe4] sm:$0xf]
        %v555 = vld [vmem:[#allocation7 + $0xe8] sm:$0xf]
        %v556 = vld [vmem:[#allocation7 + $0xec] sm:$0xf]
        %v557 = vld [vmem:[#allocation7 + $0xf0] sm:$0xf]
        %v558 = vld [vmem:[#allocation7 + $0xf4] sm:$0xf]
        %v559 = vld [vmem:[#allocation7 + $0xf8] sm:$0xf]
        %v560 = vld [vmem:[#allocation7 + $0xfc] sm:$0xf]
        %v561 = vld [vmem:[%s345] sm:$0xff]
        %v562 = vld [vmem:[%s345 + $0x8] sm:$0xff]
        %v563 = vld [vmem:[%s345 + $0x10] sm:$0xff]
        %v564 = vld [vmem:[%s345 + $0x18] sm:$0xff]
        %v565 = vld [vmem:[%s345 + $0x20] sm:$0xff]
        %v566 = vld [vmem:[%s345 + $0x28] sm:$0xff]
        %v567 = vld [vmem:[%s345 + $0x30] sm:$0xff]
        %v568 = vld [vmem:[%s345 + $0x38] sm:$0xff]
        %v569 = vld [vmem:[%s345 + $0x40] sm:$0xff]
        %v570 = vld [vmem:[%s345 + $0x48] sm:$0xff]
        %v571 = vld [vmem:[%s345 + $0x50] sm:$0xff]
        %v572 = vld [vmem:[%s345 + $0x58] sm:$0xff]
        %v573 = vld [vmem:[%s345 + $0x60] sm:$0xff]
        %v574 = vld [vmem:[%s345 + $0x68] sm:$0xff]
        %v575 = vld [vmem:[%s345 + $0x70] sm:$0xff]
        %v576 = vld [vmem:[%s345 + $0x78] sm:$0xff]
        %v577 = vld [vmem:[%s345 + $0x80] sm:$0xff]
        %v578 = vld [vmem:[%s345 + $0x88] sm:$0xff]
        %v579 = vld [vmem:[%s345 + $0x90] sm:$0xff]
        %v580 = vld [vmem:[%s345 + $0x98] sm:$0xff]
        %v581 = vld [vmem:[%s345 + $0xa0] sm:$0xff]
        %v582 = vld [vmem:[%s345 + $0xa8] sm:$0xff]
        %v583 = vld [vmem:[%s345 + $0xb0] sm:$0xff]
        %v584 = vld [vmem:[%s345 + $0xb8] sm:$0xff]
        %v585 = vld [vmem:[%s345 + $0xc0] sm:$0xff]
        %v586 = vld [vmem:[%s345 + $0xc8] sm:$0xff]
        %v587 = vld [vmem:[%s345 + $0xd0] sm:$0xff]
        %v588 = vld [vmem:[%s345 + $0xd8] sm:$0xff]
        %v589 = vld [vmem:[%s345 + $0xe0] sm:$0xff]
        %v590 = vld [vmem:[%s345 + $0xe8] sm:$0xff]
        %v591 = vld [vmem:[%s345 + $0xf0] sm:$0xff]
        %v592 = vld [vmem:[%s345 + $0xf8] sm:$0xff]
        %v593 = vld [vmem:[%s345 + $0x100] sm:$0xff]
        %v594 = vld [vmem:[%s345 + $0x108] sm:$0xff]
        %v595 = vld [vmem:[%s345 + $0x110] sm:$0xff]
        %v596 = vld [vmem:[%s345 + $0x118] sm:$0xff]
        %v597 = vld [vmem:[%s345 + $0x120] sm:$0xff]
        %v598 = vld [vmem:[%s345 + $0x128] sm:$0xff]
        %v599 = vld [vmem:[%s345 + $0x130] sm:$0xff]
        %v600 = vld [vmem:[%s345 + $0x138] sm:$0xff]
        %v601 = vld [vmem:[%s345 + $0x140] sm:$0xff]
        %v602 = vld [vmem:[%s345 + $0x148] sm:$0xff]
        %v603 = vld [vmem:[%s345 + $0x150] sm:$0xff]
        %v604 = vld [vmem:[%s345 + $0x158] sm:$0xff]
        %v605 = vld [vmem:[%s345 + $0x160] sm:$0xff]
        %v606 = vld [vmem:[%s345 + $0x168] sm:$0xff]
        %v607 = vld [vmem:[%s345 + $0x170] sm:$0xff]
        %v608 = vld [vmem:[%s345 + $0x178] sm:$0xff]
        %v609 = vld [vmem:[%s345 + $0x180] sm:$0xff]
        %v610 = vld [vmem:[%s345 + $0x188] sm:$0xff]
        %v611 = vld [vmem:[%s345 + $0x190] sm:$0xff]
        %v612 = vld [vmem:[%s345 + $0x198] sm:$0xff]
        %v613 = vld [vmem:[%s345 + $0x1a0] sm:$0xff]
        %v614 = vld [vmem:[%s345 + $0x1a8] sm:$0xff]
        %v615 = vld [vmem:[%s345 + $0x1b0] sm:$0xff]
        %v616 = vld [vmem:[%s345 + $0x1b8] sm:$0xff]
        %v617 = vld [vmem:[%s345 + $0x1c0] sm:$0xff]
        %v618 = vld [vmem:[%s345 + $0x1c8] sm:$0xff]
        %v619 = vld [vmem:[%s345 + $0x1d0] sm:$0xff]
        %v620 = vld [vmem:[%s345 + $0x1d8] sm:$0xff]
        %v621 = vld [vmem:[%s345 + $0x1e0] sm:$0xff]
        %v622 = vld [vmem:[%s345 + $0x1e8] sm:$0xff]
        %v623 = vld [vmem:[%s345 + $0x1f0] sm:$0xff]
        %v624 = vld [vmem:[%s345 + $0x1f8] sm:$0xff]
        %v625 = vld [vmem:[%s345 + $0x200] sm:$0xff]
        %v626 = vld [vmem:[%s345 + $0x208] sm:$0xff]
        %v627 = vld [vmem:[%s345 + $0x210] sm:$0xff]
        %v628 = vld [vmem:[%s345 + $0x218] sm:$0xff]
        %v629 = vld [vmem:[%s345 + $0x220] sm:$0xff]
        %v630 = vld [vmem:[%s345 + $0x228] sm:$0xff]
        %v631 = vld [vmem:[%s345 + $0x230] sm:$0xff]
        %v632 = vld [vmem:[%s345 + $0x238] sm:$0xff]
        %v633 = vld [vmem:[%s345 + $0x240] sm:$0xff]
        %v634 = vld [vmem:[%s345 + $0x248] sm:$0xff]
        %v635 = vld [vmem:[%s345 + $0x250] sm:$0xff]
        %v636 = vld [vmem:[%s345 + $0x258] sm:$0xff]
        %v637 = vld [vmem:[%s345 + $0x260] sm:$0xff]
        %v638 = vld [vmem:[%s345 + $0x268] sm:$0xff]
        %v639 = vld [vmem:[%s345 + $0x270] sm:$0xff]
        %v640 = vld [vmem:[%s345 + $0x278] sm:$0xff]
        %v641 = vld [vmem:[%s345 + $0x280] sm:$0xff]
        %v642 = vld [vmem:[%s345 + $0x288] sm:$0xff]
        %v643 = vld [vmem:[%s345 + $0x290] sm:$0xff]
        %v644 = vld [vmem:[%s345 + $0x298] sm:$0xff]
        %v645 = vld [vmem:[%s345 + $0x2a0] sm:$0xff]
        %v646 = vld [vmem:[%s345 + $0x2a8] sm:$0xff]
        %v647 = vld [vmem:[%s345 + $0x2b0] sm:$0xff]
        %v648 = vld [vmem:[%s345 + $0x2b8] sm:$0xff]
        %v649 = vld [vmem:[%s345 + $0x2c0] sm:$0xff]
        %v650 = vld [vmem:[%s345 + $0x2c8] sm:$0xff]
        %v651 = vld [vmem:[%s345 + $0x2d0] sm:$0xff]
        %v652 = vld [vmem:[%s345 + $0x2d8] sm:$0xff]
        %v653 = vld [vmem:[%s345 + $0x2e0] sm:$0xff]
        %v654 = vld [vmem:[%s345 + $0x2e8] sm:$0xff]
        %v655 = vld [vmem:[%s345 + $0x2f0] sm:$0xff]
        %v656 = vld [vmem:[%s345 + $0x2f8] sm:$0xff]
        %v657 = vpack.c.bf16 %v567, %v561
        %v658 = vpack.c.bf16 %v568, %v562
        %v659 = vpack.c.bf16 %v569, %v563
        %v660 = vpack.c.bf16 %v570, %v564
        %v661 = vpack.c.bf16 %v571, %v565
        %v662 = vpack.c.bf16 %v572, %v566
        %v663 = vpack.c.bf16 %v579, %v573
        %v664 = vpack.c.bf16 %v580, %v574
        %v665 = vpack.c.bf16 %v581, %v575
        %v666 = vpack.c.bf16 %v582, %v576
        %v667 = vpack.c.bf16 %v583, %v577
        %v668 = vpack.c.bf16 %v584, %v578
        %v669 = vpack.c.bf16 %v591, %v585
        %v670 = vpack.c.bf16 %v592, %v586
        %v671 = vpack.c.bf16 %v593, %v587
        %v672 = vpack.c.bf16 %v594, %v588
        %v673 = vpack.c.bf16 %v595, %v589
        %v674 = vpack.c.bf16 %v596, %v590
        %v675 = vpack.c.bf16 %v603, %v597
        %v676 = vpack.c.bf16 %v604, %v598
        %v677 = vpack.c.bf16 %v605, %v599
        %v678 = vpack.c.bf16 %v606, %v600
        %v679 = vpack.c.bf16 %v607, %v601
        %v680 = vpack.c.bf16 %v608, %v602
        %v681 = vpack.c.bf16 %v615, %v609
        %v682 = vpack.c.bf16 %v616, %v610
        %v683 = vpack.c.bf16 %v617, %v611
        %v684 = vpack.c.bf16 %v618, %v612
        %v685 = vpack.c.bf16 %v619, %v613
        %v686 = vpack.c.bf16 %v620, %v614
        %v687 = vpack.c.bf16 %v627, %v621
        %v688 = vpack.c.bf16 %v628, %v622
        %v689 = vpack.c.bf16 %v629, %v623
        %v690 = vpack.c.bf16 %v630, %v624
        %v691 = vpack.c.bf16 %v631, %v625
        %v692 = vpack.c.bf16 %v632, %v626
        %v693 = vpack.c.bf16 %v639, %v633
        %v694 = vpack.c.bf16 %v640, %v634
        %v695 = vpack.c.bf16 %v641, %v635
        %v696 = vpack.c.bf16 %v642, %v636
        %v697 = vpack.c.bf16 %v643, %v637
        %v698 = vpack.c.bf16 %v644, %v638
        %v699 = vpack.c.bf16 %v651, %v645
        %v700 = vpack.c.bf16 %v652, %v646
        %v701 = vpack.c.bf16 %v653, %v647
        %v702 = vpack.c.bf16 %v654, %v648
        %v703 = vpack.c.bf16 %v655, %v649
        %v704 = vpack.c.bf16 %v656, %v650
        %v705 = vld [vmem:[#allocation8] sm:$0xf]
        %v706 = vld [vmem:[#allocation8 + $0x4] sm:$0xf]
        %v707 = vld [vmem:[#allocation8 + $0x8] sm:$0xf]
        %v708 = vld [vmem:[#allocation8 + $0xc] sm:$0xf]
        %v709 = vld [vmem:[#allocation8 + $0x10] sm:$0xf]
        %v710 = vld [vmem:[#allocation8 + $0x14] sm:$0xf]
        %v711 = vld [vmem:[#allocation8 + $0x18] sm:$0xf]
        %v712 = vld [vmem:[#allocation8 + $0x1c] sm:$0xf]
        %v713 = vld [vmem:[#allocation8 + $0x20] sm:$0xf]
        %v714 = vld [vmem:[#allocation8 + $0x24] sm:$0xf]
        %v715 = vld [vmem:[#allocation8 + $0x28] sm:$0xf]
        %v716 = vld [vmem:[#allocation8 + $0x2c] sm:$0xf]
        %v717 = vld [vmem:[#allocation8 + $0x30] sm:$0xf]
        %v718 = vld [vmem:[#allocation8 + $0x34] sm:$0xf]
        %v719 = vld [vmem:[#allocation8 + $0x38] sm:$0xf]
        %v720 = vld [vmem:[#allocation8 + $0x3c] sm:$0xf]
        %v721 = vld [vmem:[#allocation8 + $0x40] sm:$0xf]
        %v722 = vld [vmem:[#allocation8 + $0x44] sm:$0xf]
        %v723 = vld [vmem:[#allocation8 + $0x48] sm:$0xf]
        %v724 = vld [vmem:[#allocation8 + $0x4c] sm:$0xf]
        %v725 = vld [vmem:[#allocation8 + $0x50] sm:$0xf]
        %v726 = vld [vmem:[#allocation8 + $0x54] sm:$0xf]
        %v727 = vld [vmem:[#allocation8 + $0x58] sm:$0xf]
        %v728 = vld [vmem:[#allocation8 + $0x5c] sm:$0xf]
        %v729 = vld [vmem:[#allocation8 + $0x60] sm:$0xf]
        %v730 = vld [vmem:[#allocation8 + $0x64] sm:$0xf]
        %v731 = vld [vmem:[#allocation8 + $0x68] sm:$0xf]
        %v732 = vld [vmem:[#allocation8 + $0x6c] sm:$0xf]
        %v733 = vld [vmem:[#allocation8 + $0x70] sm:$0xf]
        %v734 = vld [vmem:[#allocation8 + $0x74] sm:$0xf]
        %v735 = vld [vmem:[#allocation8 + $0x78] sm:$0xf]
        %v736 = vld [vmem:[#allocation8 + $0x7c] sm:$0xf]
        %v737 = vld [vmem:[#allocation8 + $0x80] sm:$0xf]
        %v738 = vld [vmem:[#allocation8 + $0x84] sm:$0xf]
        %v739 = vld [vmem:[#allocation8 + $0x88] sm:$0xf]
        %v740 = vld [vmem:[#allocation8 + $0x8c] sm:$0xf]
        %v741 = vld [vmem:[#allocation8 + $0x90] sm:$0xf]
        %v742 = vld [vmem:[#allocation8 + $0x94] sm:$0xf]
        %v743 = vld [vmem:[#allocation8 + $0x98] sm:$0xf]
        %v744 = vld [vmem:[#allocation8 + $0x9c] sm:$0xf]
        %v745 = vld [vmem:[#allocation8 + $0xa0] sm:$0xf]
        %v746 = vld [vmem:[#allocation8 + $0xa4] sm:$0xf]
        %v747 = vld [vmem:[#allocation8 + $0xa8] sm:$0xf]
        %v748 = vld [vmem:[#allocation8 + $0xac] sm:$0xf]
        %v749 = vld [vmem:[#allocation8 + $0xb0] sm:$0xf]
        %v750 = vld [vmem:[#allocation8 + $0xb4] sm:$0xf]
        %v751 = vld [vmem:[#allocation8 + $0xb8] sm:$0xf]
        %v752 = vld [vmem:[#allocation8 + $0xbc] sm:$0xf]
        %v753 = vld [vmem:[#allocation8 + $0xc0] sm:$0xf]
        %v754 = vld [vmem:[#allocation8 + $0xc4] sm:$0xf]
        %v755 = vld [vmem:[#allocation8 + $0xc8] sm:$0xf]
        %v756 = vld [vmem:[#allocation8 + $0xcc] sm:$0xf]
        %v757 = vld [vmem:[#allocation8 + $0xd0] sm:$0xf]
        %v758 = vld [vmem:[#allocation8 + $0xd4] sm:$0xf]
        %v759 = vld [vmem:[#allocation8 + $0xd8] sm:$0xf]
        %v760 = vld [vmem:[#allocation8 + $0xdc] sm:$0xf]
        %v761 = vld [vmem:[#allocation8 + $0xe0] sm:$0xf]
        %v762 = vld [vmem:[#allocation8 + $0xe4] sm:$0xf]
        %v763 = vld [vmem:[#allocation8 + $0xe8] sm:$0xf]
        %v764 = vld [vmem:[#allocation8 + $0xec] sm:$0xf]
        %v765 = vld [vmem:[#allocation8 + $0xf0] sm:$0xf]
        %v766 = vld [vmem:[#allocation8 + $0xf4] sm:$0xf]
        %v767 = vld [vmem:[#allocation8 + $0xf8] sm:$0xf]
        %v768 = vld [vmem:[#allocation8 + $0xfc] sm:$0xf]
        %v769 = vld [vmem:[#allocation8 + $0x100] sm:$0xf]
        %v770 = vld [vmem:[#allocation8 + $0x104] sm:$0xf]
        %v771 = vld [vmem:[#allocation8 + $0x108] sm:$0xf]
        %v772 = vld [vmem:[#allocation8 + $0x10c] sm:$0xf]
        %v773 = vld [vmem:[#allocation8 + $0x110] sm:$0xf]
        %v774 = vld [vmem:[#allocation8 + $0x114] sm:$0xf]
        %v775 = vld [vmem:[#allocation8 + $0x118] sm:$0xf]
        %v776 = vld [vmem:[#allocation8 + $0x11c] sm:$0xf]
        %v777 = vld [vmem:[#allocation8 + $0x120] sm:$0xf]
        %v778 = vld [vmem:[#allocation8 + $0x124] sm:$0xf]
        %v779 = vld [vmem:[#allocation8 + $0x128] sm:$0xf]
        %v780 = vld [vmem:[#allocation8 + $0x12c] sm:$0xf]
        %v781 = vld [vmem:[#allocation8 + $0x130] sm:$0xf]
        %v782 = vld [vmem:[#allocation8 + $0x134] sm:$0xf]
        %v783 = vld [vmem:[#allocation8 + $0x138] sm:$0xf]
        %v784 = vld [vmem:[#allocation8 + $0x13c] sm:$0xf]
        %v785 = vld [vmem:[#allocation8 + $0x140] sm:$0xf]
        %v786 = vld [vmem:[#allocation8 + $0x144] sm:$0xf]
        %v787 = vld [vmem:[#allocation8 + $0x148] sm:$0xf]
        %v788 = vld [vmem:[#allocation8 + $0x14c] sm:$0xf]
        %v789 = vld [vmem:[#allocation8 + $0x150] sm:$0xf]
        %v790 = vld [vmem:[#allocation8 + $0x154] sm:$0xf]
        %v791 = vld [vmem:[#allocation8 + $0x158] sm:$0xf]
        %v792 = vld [vmem:[#allocation8 + $0x15c] sm:$0xf]
        %v793 = vld [vmem:[#allocation8 + $0x160] sm:$0xf]
        %v794 = vld [vmem:[#allocation8 + $0x164] sm:$0xf]
        %v795 = vld [vmem:[#allocation8 + $0x168] sm:$0xf]
        %v796 = vld [vmem:[#allocation8 + $0x16c] sm:$0xf]
        %v797 = vld [vmem:[#allocation8 + $0x170] sm:$0xf]
        %v798 = vld [vmem:[#allocation8 + $0x174] sm:$0xf]
        %v799 = vld [vmem:[#allocation8 + $0x178] sm:$0xf]
        %v800 = vld [vmem:[#allocation8 + $0x17c] sm:$0xf]
        %v897 = vunpack.c.l.b16 %v705
        %v898 = vunpack.c.l.b16 %v706
        %v899 = vunpack.c.l.b16 %v707
        %v900 = vunpack.c.l.b16 %v708
        %v901 = vunpack.c.l.b16 %v709
        %v902 = vunpack.c.l.b16 %v710
        %v903 = vunpack.c.l.b16 %v711
        %v904 = vunpack.c.l.b16 %v712
        %v905 = vunpack.c.l.b16 %v713
        %v906 = vunpack.c.l.b16 %v714
        %v907 = vunpack.c.l.b16 %v715
        %v908 = vunpack.c.l.b16 %v716
        %v909 = vunpack.c.l.b16 %v717
        %v910 = vunpack.c.l.b16 %v718
        %v911 = vunpack.c.l.b16 %v719
        %v912 = vunpack.c.l.b16 %v720
        %v913 = vunpack.c.l.b16 %v721
        %v914 = vunpack.c.l.b16 %v722
        %v915 = vunpack.c.l.b16 %v723
        %v916 = vunpack.c.l.b16 %v724
        %v917 = vunpack.c.l.b16 %v725
        %v918 = vunpack.c.l.b16 %v726
        %v919 = vunpack.c.l.b16 %v727
        %v920 = vunpack.c.l.b16 %v728
        %v921 = vunpack.c.l.b16 %v729
        %v922 = vunpack.c.l.b16 %v730
        %v923 = vunpack.c.l.b16 %v731
        %v924 = vunpack.c.l.b16 %v732
        %v925 = vunpack.c.l.b16 %v733
        %v926 = vunpack.c.l.b16 %v734
        %v927 = vunpack.c.l.b16 %v735
        %v928 = vunpack.c.l.b16 %v736
        %v929 = vunpack.c.l.b16 %v737
        %v930 = vunpack.c.l.b16 %v738
        %v931 = vunpack.c.l.b16 %v739
        %v932 = vunpack.c.l.b16 %v740
        %v933 = vunpack.c.l.b16 %v741
        %v934 = vunpack.c.l.b16 %v742
        %v935 = vunpack.c.l.b16 %v743
        %v936 = vunpack.c.l.b16 %v744
        %v937 = vunpack.c.l.b16 %v745
        %v938 = vunpack.c.l.b16 %v746
        %v939 = vunpack.c.l.b16 %v747
        %v940 = vunpack.c.l.b16 %v748
        %v941 = vunpack.c.l.b16 %v749
        %v942 = vunpack.c.l.b16 %v750
        %v943 = vunpack.c.l.b16 %v751
        %v944 = vunpack.c.l.b16 %v752
        %v945 = vunpack.c.l.b16 %v753
        %v946 = vunpack.c.l.b16 %v754
        %v947 = vunpack.c.l.b16 %v755
        %v948 = vunpack.c.l.b16 %v756
        %v949 = vunpack.c.l.b16 %v757
        %v950 = vunpack.c.l.b16 %v758
        %v951 = vunpack.c.l.b16 %v759
        %v952 = vunpack.c.l.b16 %v760
        %v953 = vunpack.c.l.b16 %v761
        %v954 = vunpack.c.l.b16 %v762
        %v955 = vunpack.c.l.b16 %v763
        %v956 = vunpack.c.l.b16 %v764
        %v957 = vunpack.c.l.b16 %v765
        %v958 = vunpack.c.l.b16 %v766
        %v959 = vunpack.c.l.b16 %v767
        %v960 = vunpack.c.l.b16 %v768
        %v961 = vunpack.c.l.b16 %v769
        %v962 = vunpack.c.l.b16 %v770
        %v963 = vunpack.c.l.b16 %v771
        %v964 = vunpack.c.l.b16 %v772
        %v965 = vunpack.c.l.b16 %v773
        %v966 = vunpack.c.l.b16 %v774
        %v967 = vunpack.c.l.b16 %v775
        %v968 = vunpack.c.l.b16 %v776
        %v969 = vunpack.c.l.b16 %v777
        %v970 = vunpack.c.l.b16 %v778
        %v971 = vunpack.c.l.b16 %v779
        %v972 = vunpack.c.l.b16 %v780
        %v973 = vunpack.c.l.b16 %v781
        %v974 = vunpack.c.l.b16 %v782
        %v975 = vunpack.c.l.b16 %v783
        %v976 = vunpack.c.l.b16 %v784
        %v977 = vunpack.c.l.b16 %v785
        %v978 = vunpack.c.l.b16 %v786
        %v979 = vunpack.c.l.b16 %v787
        %v980 = vunpack.c.l.b16 %v788
        %v981 = vunpack.c.l.b16 %v789
        %v982 = vunpack.c.l.b16 %v790
        %v983 = vunpack.c.l.b16 %v791
        %v984 = vunpack.c.l.b16 %v792
        %v985 = vunpack.c.l.b16 %v793
        %v986 = vunpack.c.l.b16 %v794
        %v987 = vunpack.c.l.b16 %v795
        %v988 = vunpack.c.l.b16 %v796
        %v989 = vunpack.c.l.b16 %v797
        %v990 = vunpack.c.l.b16 %v798
        %v991 = vunpack.c.l.b16 %v799
        %v992 = vunpack.c.l.b16 %v800
        %v993 = vpack.c.b16 %v898, %v897
        %v994 = vpack.c.b16 %v900, %v899
        %v995 = vpack.c.b16 %v902, %v901
        %v996 = vpack.c.b16 %v904, %v903
        %v997 = vpack.c.b16 %v906, %v905
        %v998 = vpack.c.b16 %v908, %v907
        %v999 = vpack.c.b16 %v910, %v909
        %v1000 = vpack.c.b16 %v912, %v911
        %v1001 = vpack.c.b16 %v914, %v913
        %v1002 = vpack.c.b16 %v916, %v915
        %v1003 = vpack.c.b16 %v918, %v917
        %v1004 = vpack.c.b16 %v920, %v919
        %v1005 = vpack.c.b16 %v922, %v921
        %v1006 = vpack.c.b16 %v924, %v923
        %v1007 = vpack.c.b16 %v926, %v925
        %v1008 = vpack.c.b16 %v928, %v927
        %v1009 = vpack.c.b16 %v930, %v929
        %v1010 = vpack.c.b16 %v932, %v931
        %v1011 = vpack.c.b16 %v934, %v933
        %v1012 = vpack.c.b16 %v936, %v935
        %v1013 = vpack.c.b16 %v938, %v937
        %v1014 = vpack.c.b16 %v940, %v939
        %v1015 = vpack.c.b16 %v942, %v941
        %v1016 = vpack.c.b16 %v944, %v943
        %v1017 = vpack.c.b16 %v946, %v945
        %v1018 = vpack.c.b16 %v948, %v947
        %v1019 = vpack.c.b16 %v950, %v949
        %v1020 = vpack.c.b16 %v952, %v951
        %v1021 = vpack.c.b16 %v954, %v953
        %v1022 = vpack.c.b16 %v956, %v955
        %v1023 = vpack.c.b16 %v958, %v957
        %v1024 = vpack.c.b16 %v960, %v959
        %v1025 = vpack.c.b16 %v962, %v961
        %v1026 = vpack.c.b16 %v964, %v963
        %v1027 = vpack.c.b16 %v966, %v965
        %v1028 = vpack.c.b16 %v968, %v967
        %v1029 = vpack.c.b16 %v970, %v969
        %v1030 = vpack.c.b16 %v972, %v971
        %v1031 = vpack.c.b16 %v974, %v973
        %v1032 = vpack.c.b16 %v976, %v975
        %v1033 = vpack.c.b16 %v978, %v977
        %v1034 = vpack.c.b16 %v980, %v979
        %v1035 = vpack.c.b16 %v982, %v981
        %v1036 = vpack.c.b16 %v984, %v983
        %v1037 = vpack.c.b16 %v986, %v985
        %v1038 = vpack.c.b16 %v988, %v987
        %v1039 = vpack.c.b16 %v990, %v989
        %v1040 = vpack.c.b16 %v992, %v991
        %1089 = vmatprep.subr.bf16.mxu0 0
        %1090 = vmatpush1.bf16.msra.mxu0 %v993
        %1091 = vmatprep.subr.bf16.mxu0 0
        %1092 = vmatpush1.bf16.msra.mxu0 %v994
        %1093 = vmatprep.subr.bf16.mxu0 0
        %1094 = vmatpush1.bf16.msra.mxu0 %v995
        %1095 = vmatprep.subr.bf16.mxu0 0
        %1096 = vmatpush1.bf16.msra.mxu0 %v996
        %1097 = vmatprep.subr.bf16.mxu0 0
        %1098 = vmatpush1.bf16.msra.mxu0 %v997
        %1099 = vmatprep.subr.bf16.mxu0 0
        %1100 = vmatpush1.bf16.msra.mxu0 %v998
        %1101 = vmatprep.subr.bf16.mxu0 0
        %1102 = vmatpush1.bf16.msra.mxu0 %v999
        %1103 = vmatprep.subr.bf16.mxu0 0
        %1104 = vmatpush1.bf16.msra.mxu0 %v1000
        %1105 = vmatprep.subr.bf16.mxu0 0
        %1106 = vmatpush1.bf16.msra.mxu0 %v1001
        %1107 = vmatprep.subr.bf16.mxu0 0
        %1108 = vmatpush1.bf16.msra.mxu0 %v1002
        %1109 = vmatprep.subr.bf16.mxu0 0
        %1110 = vmatpush1.bf16.msra.mxu0 %v1003
        %1111 = vmatprep.subr.bf16.mxu0 0
        %1112 = vmatpush1.bf16.msra.mxu0 %v1004
        %1113 = vmatprep.subr.bf16.mxu0 0
        %1114 = vmatpush1.bf16.msra.mxu0 %v1005
        %1115 = vmatprep.subr.bf16.mxu0 0
        %1116 = vmatpush1.bf16.msra.mxu0 %v1006
        %1117 = vmatprep.subr.bf16.mxu0 0
        %1118 = vmatpush1.bf16.msra.mxu0 %v1007
        %1119 = vmatprep.subr.bf16.mxu0 0
        %1120 = vmatpush1.bf16.msra.mxu0 %v1008
        %1121 = vmatprep.mubr.bf16.mxu0 %v658
        %1122 = vmatmul.mubr.bf16.gmra.mrb[0].mxu0 %v657
        %v1123 = vpop.f32.mrb[0].mxu0
        %v1124 = vadd.f32 0.0, %v1123
        %v1125 = vpop.f32.mrb[0].mxu0
        %v1126 = vpop.f32.mrb[0].mxu0
        %v1127 = vadd.f32 0.0, %v1126
        %v1128 = vpop.f32.mrb[0].mxu0
        %1129 = vmatprep.mubr.bf16.mxu0 %v664
        %1130 = vmatmul.mubr.bf16.gmra.mrb[0].mxu0 %v663
        %v1131 = vpop.f32.mrb[0].mxu0
        %v1132 = vadd.f32 0.0, %v1131
        %v1133 = vpop.f32.mrb[0].mxu0
        %v1134 = vpop.f32.mrb[0].mxu0
        %v1135 = vadd.f32 0.0, %v1134
        %v1136 = vpop.f32.mrb[0].mxu0
        %1137 = vmatprep.mubr.bf16.mxu0 %v670
        %1138 = vmatmul.mubr.bf16.gmra.mrb[0].mxu0 %v669
        %v1139 = vpop.f32.mrb[0].mxu0
        %v1140 = vadd.f32 0.0, %v1139
        %v1141 = vpop.f32.mrb[0].mxu0
        %v1142 = vpop.f32.mrb[0].mxu0
        %v1143 = vadd.f32 0.0, %v1142
        %v1144 = vpop.f32.mrb[0].mxu0
        %1145 = vmatprep.mubr.bf16.mxu0 %v676
        %1146 = vmatmul.mubr.bf16.gmra.mrb[0].mxu0 %v675
        %v1147 = vpop.f32.mrb[0].mxu0
        %v1148 = vadd.f32 0.0, %v1147
        %v1149 = vpop.f32.mrb[0].mxu0
        %v1150 = vpop.f32.mrb[0].mxu0
        %v1151 = vadd.f32 0.0, %v1150
        %v1152 = vpop.f32.mrb[0].mxu0
        %1153 = vmatprep.mubr.bf16.mxu0 %v682
        %1154 = vmatmul.mubr.bf16.gmra.mrb[0].mxu0 %v681
        %v1155 = vpop.f32.mrb[0].mxu0
        %v1156 = vadd.f32 0.0, %v1155
        %v1157 = vpop.f32.mrb[0].mxu0
        %v1158 = vpop.f32.mrb[0].mxu0
        %v1159 = vadd.f32 0.0, %v1158
        %v1160 = vpop.f32.mrb[0].mxu0
        %1161 = vmatprep.mubr.bf16.mxu0 %v688
        %1162 = vmatmul.mubr.bf16.gmra.mrb[0].mxu0 %v687
        %v1163 = vpop.f32.mrb[0].mxu0
        %v1164 = vadd.f32 0.0, %v1163
        %v1165 = vpop.f32.mrb[0].mxu0
        %v1166 = vpop.f32.mrb[0].mxu0
        %v1167 = vadd.f32 0.0, %v1166
        %v1168 = vpop.f32.mrb[0].mxu0
        %1169 = vmatprep.mubr.bf16.mxu0 %v694
        %1170 = vmatmul.mubr.bf16.gmra.mrb[0].mxu0 %v693
        %v1171 = vpop.f32.mrb[0].mxu0
        %v1172 = vadd.f32 0.0, %v1171
        %v1173 = vpop.f32.mrb[0].mxu0
        %v1174 = vpop.f32.mrb[0].mxu0
        %v1175 = vadd.f32 0.0, %v1174
        %v1176 = vpop.f32.mrb[0].mxu0
        %1177 = vmatprep.mubr.bf16.mxu0 %v700
        %1178 = vmatmul.mubr.bf16.gmra.mrb[0].mxu0 %v699
        %v1179 = vpop.f32.mrb[0].mxu0
        %v1180 = vadd.f32 0.0, %v1179
        %v1181 = vpop.f32.mrb[0].mxu0
        %v1182 = vpop.f32.mrb[0].mxu0
        %v1183 = vadd.f32 0.0, %v1182
        %v1184 = vpop.f32.mrb[0].mxu0
        %1185 = vdwg.mxu0
        %1186 = vmatprep.subr.bf16.mxu0 0
        %1187 = vmatpush1.bf16.msra.mxu0 %v1009
        %1188 = vmatprep.subr.bf16.mxu0 0
        %1189 = vmatpush1.bf16.msra.mxu0 %v1010
        %1190 = vmatprep.subr.bf16.mxu0 0
        %1191 = vmatpush1.bf16.msra.mxu0 %v1011
        %1192 = vmatprep.subr.bf16.mxu0 0
        %1193 = vmatpush1.bf16.msra.mxu0 %v1012
        %1194 = vmatprep.subr.bf16.mxu0 0
        %1195 = vmatpush1.bf16.msra.mxu0 %v1013
        %1196 = vmatprep.subr.bf16.mxu0 0
        %1197 = vmatpush1.bf16.msra.mxu0 %v1014
        %1198 = vmatprep.subr.bf16.mxu0 0
        %1199 = vmatpush1.bf16.msra.mxu0 %v1015
        %1200 = vmatprep.subr.bf16.mxu0 0
        %1201 = vmatpush1.bf16.msra.mxu0 %v1016
        %1202 = vmatprep.subr.bf16.mxu0 0
        %1203 = vmatpush1.bf16.msra.mxu0 %v1017
        %1204 = vmatprep.subr.bf16.mxu0 0
        %1205 = vmatpush1.bf16.msra.mxu0 %v1018
        %1206 = vmatprep.subr.bf16.mxu0 0
        %1207 = vmatpush1.bf16.msra.mxu0 %v1019
        %1208 = vmatprep.subr.bf16.mxu0 0
        %1209 = vmatpush1.bf16.msra.mxu0 %v1020
        %1210 = vmatprep.subr.bf16.mxu0 0
        %1211 = vmatpush1.bf16.msra.mxu0 %v1021
        %1212 = vmatprep.subr.bf16.mxu0 0
        %1213 = vmatpush1.bf16.msra.mxu0 %v1022
        %1214 = vmatprep.subr.bf16.mxu0 0
        %1215 = vmatpush1.bf16.msra.mxu0 %v1023
        %1216 = vmatprep.subr.bf16.mxu0 0
        %1217 = vmatpush1.bf16.msra.mxu0 %v1024
        %1218 = vmatprep.mubr.bf16.mxu0 %v660
        %1219 = vmatmul.mubr.bf16.gmra.mrb[0].mxu0 %v659
        %v1220 = vpop.f32.mrb[0].mxu0
        %v1221 = vadd.f32 %v1124, %v1220
        %v1222 = vpop.f32.mrb[0].mxu0
        %v1223 = vpop.f32.mrb[0].mxu0
        %v1224 = vadd.f32 %v1127, %v1223
        %v1225 = vpop.f32.mrb[0].mxu0
        %1226 = vmatprep.mubr.bf16.mxu0 %v666
        %1227 = vmatmul.mubr.bf16.gmra.mrb[0].mxu0 %v665
        %v1228 = vpop.f32.mrb[0].mxu0
        %v1229 = vadd.f32 %v1132, %v1228
        %v1230 = vpop.f32.mrb[0].mxu0
        %v1231 = vpop.f32.mrb[0].mxu0
        %v1232 = vadd.f32 %v1135, %v1231
        %v1233 = vpop.f32.mrb[0].mxu0
        %1234 = vmatprep.mubr.bf16.mxu0 %v672
        %1235 = vmatmul.mubr.bf16.gmra.mrb[0].mxu0 %v671
        %v1236 = vpop.f32.mrb[0].mxu0
        %v1237 = vadd.f32 %v1140, %v1236
        %v1238 = vpop.f32.mrb[0].mxu0
        %v1239 = vpop.f32.mrb[0].mxu0
        %v1240 = vadd.f32 %v1143, %v1239
        %v1241 = vpop.f32.mrb[0].mxu0
        %1242 = vmatprep.mubr.bf16.mxu0 %v678
        %1243 = vmatmul.mubr.bf16.gmra.mrb[0].mxu0 %v677
        %v1244 = vpop.f32.mrb[0].mxu0
        %v1245 = vadd.f32 %v1148, %v1244
        %v1246 = vpop.f32.mrb[0].mxu0
        %v1247 = vpop.f32.mrb[0].mxu0
        %v1248 = vadd.f32 %v1151, %v1247
        %v1249 = vpop.f32.mrb[0].mxu0
        %1250 = vmatprep.mubr.bf16.mxu0 %v684
        %1251 = vmatmul.mubr.bf16.gmra.mrb[0].mxu0 %v683
        %v1252 = vpop.f32.mrb[0].mxu0
        %v1253 = vadd.f32 %v1156, %v1252
        %v1254 = vpop.f32.mrb[0].mxu0
        %v1255 = vpop.f32.mrb[0].mxu0
        %v1256 = vadd.f32 %v1159, %v1255
        %v1257 = vpop.f32.mrb[0].mxu0
        %1258 = vmatprep.mubr.bf16.mxu0 %v690
        %1259 = vmatmul.mubr.bf16.gmra.mrb[0].mxu0 %v689
        %v1260 = vpop.f32.mrb[0].mxu0
        %v1261 = vadd.f32 %v1164, %v1260
        %v1262 = vpop.f32.mrb[0].mxu0
        %v1263 = vpop.f32.mrb[0].mxu0
        %v1264 = vadd.f32 %v1167, %v1263
        %v1265 = vpop.f32.mrb[0].mxu0
        %1266 = vmatprep.mubr.bf16.mxu0 %v696
        %1267 = vmatmul.mubr.bf16.gmra.mrb[0].mxu0 %v695
        %v1268 = vpop.f32.mrb[0].mxu0
        %v1269 = vadd.f32 %v1172, %v1268
        %v1270 = vpop.f32.mrb[0].mxu0
        %v1271 = vpop.f32.mrb[0].mxu0
        %v1272 = vadd.f32 %v1175, %v1271
        %v1273 = vpop.f32.mrb[0].mxu0
        %1274 = vmatprep.mubr.bf16.mxu0 %v702
        %1275 = vmatmul.mubr.bf16.gmra.mrb[0].mxu0 %v701
        %v1276 = vpop.f32.mrb[0].mxu0
        %v1277 = vadd.f32 %v1180, %v1276
        %v1278 = vpop.f32.mrb[0].mxu0
        %v1279 = vpop.f32.mrb[0].mxu0
        %v1280 = vadd.f32 %v1183, %v1279
        %v1281 = vpop.f32.mrb[0].mxu0
        %1282 = vdwg.mxu0
        %1283 = vmatprep.subr.bf16.mxu0 0
        %1284 = vmatpush1.bf16.msra.mxu0 %v1025
        %1285 = vmatprep.subr.bf16.mxu0 0
        %1286 = vmatpush1.bf16.msra.mxu0 %v1026
        %1287 = vmatprep.subr.bf16.mxu0 0
        %1288 = vmatpush1.bf16.msra.mxu0 %v1027
        %1289 = vmatprep.subr.bf16.mxu0 0
        %1290 = vmatpush1.bf16.msra.mxu0 %v1028
        %1291 = vmatprep.subr.bf16.mxu0 0
        %1292 = vmatpush1.bf16.msra.mxu0 %v1029
        %1293 = vmatprep.subr.bf16.mxu0 0
        %1294 = vmatpush1.bf16.msra.mxu0 %v1030
        %1295 = vmatprep.subr.bf16.mxu0 0
        %1296 = vmatpush1.bf16.msra.mxu0 %v1031
        %1297 = vmatprep.subr.bf16.mxu0 0
        %1298 = vmatpush1.bf16.msra.mxu0 %v1032
        %1299 = vmatprep.subr.bf16.mxu0 0
        %1300 = vmatpush1.bf16.msra.mxu0 %v1033
        %1301 = vmatprep.subr.bf16.mxu0 0
        %1302 = vmatpush1.bf16.msra.mxu0 %v1034
        %1303 = vmatprep.subr.bf16.mxu0 0
        %1304 = vmatpush1.bf16.msra.mxu0 %v1035
        %1305 = vmatprep.subr.bf16.mxu0 0
        %1306 = vmatpush1.bf16.msra.mxu0 %v1036
        %1307 = vmatprep.subr.bf16.mxu0 0
        %1308 = vmatpush1.bf16.msra.mxu0 %v1037
        %1309 = vmatprep.subr.bf16.mxu0 0
        %1310 = vmatpush1.bf16.msra.mxu0 %v1038
        %1311 = vmatprep.subr.bf16.mxu0 0
        %1312 = vmatpush1.bf16.msra.mxu0 %v1039
        %1313 = vmatprep.subr.bf16.mxu0 0
        %1314 = vmatpush1.bf16.msra.mxu0 %v1040
        %1315 = vmatprep.mubr.bf16.mxu0 %v662
        %1316 = vmatmul.mubr.bf16.gmra.mrb[0].mxu0 %v661
        %v1317 = vpop.f32.mrb[0].mxu0
        %v1318 = vadd.f32 %v1221, %v1317
        %v1319 = vpop.f32.mrb[0].mxu0
        %v1320 = vpop.f32.mrb[0].mxu0
        %v1321 = vadd.f32 %v1224, %v1320
        %v1322 = vpop.f32.mrb[0].mxu0
        %1323 = vmatprep.mubr.bf16.mxu0 %v668
        %1324 = vmatmul.mubr.bf16.gmra.mrb[0].mxu0 %v667
        %v1325 = vpop.f32.mrb[0].mxu0
        %v1326 = vadd.f32 %v1229, %v1325
        %v1327 = vpop.f32.mrb[0].mxu0
        %v1328 = vpop.f32.mrb[0].mxu0
        %v1329 = vadd.f32 %v1232, %v1328
        %v1330 = vpop.f32.mrb[0].mxu0
        %1331 = vmatprep.mubr.bf16.mxu0 %v674
        %1332 = vmatmul.mubr.bf16.gmra.mrb[0].mxu0 %v673
        %v1333 = vpop.f32.mrb[0].mxu0
        %v1334 = vadd.f32 %v1237, %v1333
        %v1335 = vpop.f32.mrb[0].mxu0
        %v1336 = vpop.f32.mrb[0].mxu0
        %v1337 = vadd.f32 %v1240, %v1336
        %v1338 = vpop.f32.mrb[0].mxu0
        %1339 = vmatprep.mubr.bf16.mxu0 %v680
        %1340 = vmatmul.mubr.bf16.gmra.mrb[0].mxu0 %v679
        %v1341 = vpop.f32.mrb[0].mxu0
        %v1342 = vadd.f32 %v1245, %v1341
        %v1343 = vpop.f32.mrb[0].mxu0
        %v1344 = vpop.f32.mrb[0].mxu0
        %v1345 = vadd.f32 %v1248, %v1344
        %v1346 = vpop.f32.mrb[0].mxu0
        %1347 = vmatprep.mubr.bf16.mxu0 %v686
        %1348 = vmatmul.mubr.bf16.gmra.mrb[0].mxu0 %v685
        %v1349 = vpop.f32.mrb[0].mxu0
        %v1350 = vadd.f32 %v1253, %v1349
        %v1351 = vpop.f32.mrb[0].mxu0
        %v1352 = vpop.f32.mrb[0].mxu0
        %v1353 = vadd.f32 %v1256, %v1352
        %v1354 = vpop.f32.mrb[0].mxu0
        %1355 = vmatprep.mubr.bf16.mxu0 %v692
        %1356 = vmatmul.mubr.bf16.gmra.mrb[0].mxu0 %v691
        %v1357 = vpop.f32.mrb[0].mxu0
        %v1358 = vadd.f32 %v1261, %v1357
        %v1359 = vpop.f32.mrb[0].mxu0
        %v1360 = vpop.f32.mrb[0].mxu0
        %v1361 = vadd.f32 %v1264, %v1360
        %v1362 = vpop.f32.mrb[0].mxu0
        %1363 = vmatprep.mubr.bf16.mxu0 %v698
        %1364 = vmatmul.mubr.bf16.gmra.mrb[0].mxu0 %v697
        %v1365 = vpop.f32.mrb[0].mxu0
        %v1366 = vadd.f32 %v1269, %v1365
        %v1367 = vpop.f32.mrb[0].mxu0
        %v1368 = vpop.f32.mrb[0].mxu0
        %v1369 = vadd.f32 %v1272, %v1368
        %v1370 = vpop.f32.mrb[0].mxu0
        %1371 = vmatprep.mubr.bf16.mxu0 %v704
        %1372 = vmatmul.mubr.bf16.gmra.mrb[0].mxu0 %v703
        %v1373 = vpop.f32.mrb[0].mxu0
        %v1374 = vadd.f32 %v1277, %v1373
        %v1375 = vpop.f32.mrb[0].mxu0
        %v1376 = vpop.f32.mrb[0].mxu0
        %v1377 = vadd.f32 %v1280, %v1376
        %v1378 = vpop.f32.mrb[0].mxu0
        %1379 = vdwg.mxu0
        %v1444 = vunpack.c.l.b16 %v497
        %v1445 = vunpack.c.l.b16 %v498
        %v1446 = vunpack.c.l.b16 %v499
        %v1447 = vunpack.c.l.b16 %v500
        %v1448 = vunpack.c.l.b16 %v501
        %v1449 = vunpack.c.l.b16 %v502
        %v1450 = vunpack.c.l.b16 %v503
        %v1451 = vunpack.c.l.b16 %v504
        %v1452 = vunpack.c.l.b16 %v505
        %v1453 = vunpack.c.l.b16 %v506
        %v1454 = vunpack.c.l.b16 %v507
        %v1455 = vunpack.c.l.b16 %v508
        %v1456 = vunpack.c.l.b16 %v509
        %v1457 = vunpack.c.l.b16 %v510
        %v1458 = vunpack.c.l.b16 %v511
        %v1459 = vunpack.c.l.b16 %v512
        %v1460 = vunpack.c.l.b16 %v513
        %v1461 = vunpack.c.l.b16 %v514
        %v1462 = vunpack.c.l.b16 %v515
        %v1463 = vunpack.c.l.b16 %v516
        %v1464 = vunpack.c.l.b16 %v517
        %v1465 = vunpack.c.l.b16 %v518
        %v1466 = vunpack.c.l.b16 %v519
        %v1467 = vunpack.c.l.b16 %v520
        %v1468 = vunpack.c.l.b16 %v521
        %v1469 = vunpack.c.l.b16 %v522
        %v1470 = vunpack.c.l.b16 %v523
        %v1471 = vunpack.c.l.b16 %v524
        %v1472 = vunpack.c.l.b16 %v525
        %v1473 = vunpack.c.l.b16 %v526
        %v1474 = vunpack.c.l.b16 %v527
        %v1475 = vunpack.c.l.b16 %v528
        %v1476 = vunpack.c.l.b16 %v529
        %v1477 = vunpack.c.l.b16 %v530
        %v1478 = vunpack.c.l.b16 %v531
        %v1479 = vunpack.c.l.b16 %v532
        %v1480 = vunpack.c.l.b16 %v533
        %v1481 = vunpack.c.l.b16 %v534
        %v1482 = vunpack.c.l.b16 %v535
        %v1483 = vunpack.c.l.b16 %v536
        %v1484 = vunpack.c.l.b16 %v537
        %v1485 = vunpack.c.l.b16 %v538
        %v1486 = vunpack.c.l.b16 %v539
        %v1487 = vunpack.c.l.b16 %v540
        %v1488 = vunpack.c.l.b16 %v541
        %v1489 = vunpack.c.l.b16 %v542
        %v1490 = vunpack.c.l.b16 %v543
        %v1491 = vunpack.c.l.b16 %v544
        %v1492 = vunpack.c.l.b16 %v545
        %v1493 = vunpack.c.l.b16 %v546
        %v1494 = vunpack.c.l.b16 %v547
        %v1495 = vunpack.c.l.b16 %v548
        %v1496 = vunpack.c.l.b16 %v549
        %v1497 = vunpack.c.l.b16 %v550
        %v1498 = vunpack.c.l.b16 %v551
        %v1499 = vunpack.c.l.b16 %v552
        %v1500 = vunpack.c.l.b16 %v553
        %v1501 = vunpack.c.l.b16 %v554
        %v1502 = vunpack.c.l.b16 %v555
        %v1503 = vunpack.c.l.b16 %v556
        %v1504 = vunpack.c.l.b16 %v557
        %v1505 = vunpack.c.l.b16 %v558
        %v1506 = vunpack.c.l.b16 %v559
        %v1507 = vunpack.c.l.b16 %v560
        %v1508 = vpack.c.b16 %v1445, %v1444
        %v1509 = vpack.c.b16 %v1447, %v1446
        %v1510 = vpack.c.b16 %v1449, %v1448
        %v1511 = vpack.c.b16 %v1451, %v1450
        %v1512 = vpack.c.b16 %v1453, %v1452
        %v1513 = vpack.c.b16 %v1455, %v1454
        %v1514 = vpack.c.b16 %v1457, %v1456
        %v1515 = vpack.c.b16 %v1459, %v1458
        %v1516 = vpack.c.b16 %v1461, %v1460
        %v1517 = vpack.c.b16 %v1463, %v1462
        %v1518 = vpack.c.b16 %v1465, %v1464
        %v1519 = vpack.c.b16 %v1467, %v1466
        %v1520 = vpack.c.b16 %v1469, %v1468
        %v1521 = vpack.c.b16 %v1471, %v1470
        %v1522 = vpack.c.b16 %v1473, %v1472
        %v1523 = vpack.c.b16 %v1475, %v1474
        %v1524 = vpack.c.b16 %v1477, %v1476
        %v1525 = vpack.c.b16 %v1479, %v1478
        %v1526 = vpack.c.b16 %v1481, %v1480
        %v1527 = vpack.c.b16 %v1483, %v1482
        %v1528 = vpack.c.b16 %v1485, %v1484
        %v1529 = vpack.c.b16 %v1487, %v1486
        %v1530 = vpack.c.b16 %v1489, %v1488
        %v1531 = vpack.c.b16 %v1491, %v1490
        %v1532 = vpack.c.b16 %v1493, %v1492
        %v1533 = vpack.c.b16 %v1495, %v1494
        %v1534 = vpack.c.b16 %v1497, %v1496
        %v1535 = vpack.c.b16 %v1499, %v1498
        %v1536 = vpack.c.b16 %v1501, %v1500
        %v1537 = vpack.c.b16 %v1503, %v1502
        %v1538 = vpack.c.b16 %v1505, %v1504
        %v1539 = vpack.c.b16 %v1507, %v1506
        %1572 = vmatprep.subr.bf16.mxu0 0
        %1573 = vmatpush1.bf16.msra.mxu0 %v1508
        %1574 = vmatprep.subr.bf16.mxu0 0
        %1575 = vmatpush1.bf16.msra.mxu0 %v1509
        %1576 = vmatprep.subr.bf16.mxu0 0
        %1577 = vmatpush1.bf16.msra.mxu0 %v1510
        %1578 = vmatprep.subr.bf16.mxu0 0
        %1579 = vmatpush1.bf16.msra.mxu0 %v1511
        %1580 = vmatprep.subr.bf16.mxu0 0
        %1581 = vmatpush1.bf16.msra.mxu0 %v1512
        %1582 = vmatprep.subr.bf16.mxu0 0
        %1583 = vmatpush1.bf16.msra.mxu0 %v1513
        %1584 = vmatprep.subr.bf16.mxu0 0
        %1585 = vmatpush1.bf16.msra.mxu0 %v1514
        %1586 = vmatprep.subr.bf16.mxu0 0
        %1587 = vmatpush1.bf16.msra.mxu0 %v1515
        %1588 = vmatprep.subr.bf16.mxu0 0
        %1589 = vmatpush1.bf16.msra.mxu0 %v1516
        %1590 = vmatprep.subr.bf16.mxu0 0
        %1591 = vmatpush1.bf16.msra.mxu0 %v1517
        %1592 = vmatprep.subr.bf16.mxu0 0
        %1593 = vmatpush1.bf16.msra.mxu0 %v1518
        %1594 = vmatprep.subr.bf16.mxu0 0
        %1595 = vmatpush1.bf16.msra.mxu0 %v1519
        %1596 = vmatprep.subr.bf16.mxu0 0
        %1597 = vmatpush1.bf16.msra.mxu0 %v1520
        %1598 = vmatprep.subr.bf16.mxu0 0
        %1599 = vmatpush1.bf16.msra.mxu0 %v1521
        %1600 = vmatprep.subr.bf16.mxu0 0
        %1601 = vmatpush1.bf16.msra.mxu0 %v1522
        %1602 = vmatprep.subr.bf16.mxu0 0
        %1603 = vmatpush1.bf16.msra.mxu0 %v1523
        %1604 = vmatprep.mubr.bf16.mxu0 %v466
        %1605 = vmatmul.mubr.bf16.gmra.mrb[0].mxu0 %v465
        %v1606 = vpop.f32.mrb[0].mxu0
        %v1607 = vadd.f32 %v1318, %v1606
        %v1608 = vpop.f32.mrb[0].mxu0
        %v1609 = vpop.f32.mrb[0].mxu0
        %v1610 = vadd.f32 %v1321, %v1609
        %v1611 = vpop.f32.mrb[0].mxu0
        %1612 = vmatprep.mubr.bf16.mxu0 %v470
        %1613 = vmatmul.mubr.bf16.gmra.mrb[0].mxu0 %v469
        %v1614 = vpop.f32.mrb[0].mxu0
        %v1615 = vadd.f32 %v1326, %v1614
        %v1616 = vpop.f32.mrb[0].mxu0
        %v1617 = vpop.f32.mrb[0].mxu0
        %v1618 = vadd.f32 %v1329, %v1617
        %v1619 = vpop.f32.mrb[0].mxu0
        %1620 = vmatprep.mubr.bf16.mxu0 %v474
        %1621 = vmatmul.mubr.bf16.gmra.mrb[0].mxu0 %v473
        %v1622 = vpop.f32.mrb[0].mxu0
        %v1623 = vadd.f32 %v1334, %v1622
        %v1624 = vpop.f32.mrb[0].mxu0
        %v1625 = vpop.f32.mrb[0].mxu0
        %v1626 = vadd.f32 %v1337, %v1625
        %v1627 = vpop.f32.mrb[0].mxu0
        %1628 = vmatprep.mubr.bf16.mxu0 %v478
        %1629 = vmatmul.mubr.bf16.gmra.mrb[0].mxu0 %v477
        %v1630 = vpop.f32.mrb[0].mxu0
        %v1631 = vadd.f32 %v1342, %v1630
        %v1632 = vpop.f32.mrb[0].mxu0
        %v1633 = vpop.f32.mrb[0].mxu0
        %v1634 = vadd.f32 %v1345, %v1633
        %v1635 = vpop.f32.mrb[0].mxu0
        %1636 = vmatprep.mubr.bf16.mxu0 %v482
        %1637 = vmatmul.mubr.bf16.gmra.mrb[0].mxu0 %v481
        %v1638 = vpop.f32.mrb[0].mxu0
        %v1639 = vadd.f32 %v1350, %v1638
        %v1640 = vpop.f32.mrb[0].mxu0
        %v1641 = vpop.f32.mrb[0].mxu0
        %v1642 = vadd.f32 %v1353, %v1641
        %v1643 = vpop.f32.mrb[0].mxu0
        %1644 = vmatprep.mubr.bf16.mxu0 %v486
        %1645 = vmatmul.mubr.bf16.gmra.mrb[0].mxu0 %v485
        %v1646 = vpop.f32.mrb[0].mxu0
        %v1647 = vadd.f32 %v1358, %v1646
        %v1648 = vpop.f32.mrb[0].mxu0
        %v1649 = vpop.f32.mrb[0].mxu0
        %v1650 = vadd.f32 %v1361, %v1649
        %v1651 = vpop.f32.mrb[0].mxu0
        %1652 = vmatprep.mubr.bf16.mxu0 %v490
        %1653 = vmatmul.mubr.bf16.gmra.mrb[0].mxu0 %v489
        %v1654 = vpop.f32.mrb[0].mxu0
        %v1655 = vadd.f32 %v1366, %v1654
        %v1656 = vpop.f32.mrb[0].mxu0
        %v1657 = vpop.f32.mrb[0].mxu0
        %v1658 = vadd.f32 %v1369, %v1657
        %v1659 = vpop.f32.mrb[0].mxu0
        %1660 = vmatprep.mubr.bf16.mxu0 %v494
        %1661 = vmatmul.mubr.bf16.gmra.mrb[0].mxu0 %v493
        %v1662 = vpop.f32.mrb[0].mxu0
        %v1663 = vadd.f32 %v1374, %v1662
        %v1664 = vpop.f32.mrb[0].mxu0
        %v1665 = vpop.f32.mrb[0].mxu0
        %v1666 = vadd.f32 %v1377, %v1665
        %v1667 = vpop.f32.mrb[0].mxu0
        %1668 = vdwg.mxu0
        %1669 = vmatprep.subr.bf16.mxu0 0
        %1670 = vmatpush1.bf16.msra.mxu0 %v1524
        %1671 = vmatprep.subr.bf16.mxu0 0
        %1672 = vmatpush1.bf16.msra.mxu0 %v1525
        %1673 = vmatprep.subr.bf16.mxu0 0
        %1674 = vmatpush1.bf16.msra.mxu0 %v1526
        %1675 = vmatprep.subr.bf16.mxu0 0
        %1676 = vmatpush1.bf16.msra.mxu0 %v1527
        %1677 = vmatprep.subr.bf16.mxu0 0
        %1678 = vmatpush1.bf16.msra.mxu0 %v1528
        %1679 = vmatprep.subr.bf16.mxu0 0
        %1680 = vmatpush1.bf16.msra.mxu0 %v1529
        %1681 = vmatprep.subr.bf16.mxu0 0
        %1682 = vmatpush1.bf16.msra.mxu0 %v1530
        %1683 = vmatprep.subr.bf16.mxu0 0
        %1684 = vmatpush1.bf16.msra.mxu0 %v1531
        %1685 = vmatprep.subr.bf16.mxu0 0
        %1686 = vmatpush1.bf16.msra.mxu0 %v1532
        %1687 = vmatprep.subr.bf16.mxu0 0
        %1688 = vmatpush1.bf16.msra.mxu0 %v1533
        %1689 = vmatprep.subr.bf16.mxu0 0
        %1690 = vmatpush1.bf16.msra.mxu0 %v1534
        %1691 = vmatprep.subr.bf16.mxu0 0
        %1692 = vmatpush1.bf16.msra.mxu0 %v1535
        %1693 = vmatprep.subr.bf16.mxu0 0
        %1694 = vmatpush1.bf16.msra.mxu0 %v1536
        %1695 = vmatprep.subr.bf16.mxu0 0
        %1696 = vmatpush1.bf16.msra.mxu0 %v1537
        %1697 = vmatprep.subr.bf16.mxu0 0
        %1698 = vmatpush1.bf16.msra.mxu0 %v1538
        %1699 = vmatprep.subr.bf16.mxu0 0
        %1700 = vmatpush1.bf16.msra.mxu0 %v1539
        %1701 = vmatprep.mubr.bf16.mxu0 %v468
        %1702 = vmatmul.mubr.bf16.gmra.mrb[0].mxu0 %v467
        %v1703 = vpop.f32.mrb[0].mxu0
        %v1704 = vadd.f32 %v1607, %v1703
        %v1705 = vpop.f32.mrb[0].mxu0
        %v1706 = vpop.f32.mrb[0].mxu0
        %v1707 = vadd.f32 %v1610, %v1706
        %v1708 = vpop.f32.mrb[0].mxu0
        %1709 = vmatprep.mubr.bf16.mxu0 %v472
        %1710 = vmatmul.mubr.bf16.gmra.mrb[0].mxu0 %v471
        %v1711 = vpop.f32.mrb[0].mxu0
        %v1712 = vadd.f32 %v1615, %v1711
        %v1713 = vpop.f32.mrb[0].mxu0
        %v1714 = vpop.f32.mrb[0].mxu0
        %v1715 = vadd.f32 %v1618, %v1714
        %v1716 = vpop.f32.mrb[0].mxu0
        %1717 = vmatprep.mubr.bf16.mxu0 %v476
        %1718 = vmatmul.mubr.bf16.gmra.mrb[0].mxu0 %v475
        %v1719 = vpop.f32.mrb[0].mxu0
        %v1720 = vadd.f32 %v1623, %v1719
        %v1721 = vpop.f32.mrb[0].mxu0
        %v1722 = vpop.f32.mrb[0].mxu0
        %v1723 = vadd.f32 %v1626, %v1722
        %v1724 = vpop.f32.mrb[0].mxu0
        %1725 = vmatprep.mubr.bf16.mxu0 %v480
        %1726 = vmatmul.mubr.bf16.gmra.mrb[0].mxu0 %v479
        %v1727 = vpop.f32.mrb[0].mxu0
        %v1728 = vadd.f32 %v1631, %v1727
        %v1729 = vpop.f32.mrb[0].mxu0
        %v1730 = vpop.f32.mrb[0].mxu0
        %v1731 = vadd.f32 %v1634, %v1730
        %v1732 = vpop.f32.mrb[0].mxu0
        %1733 = vmatprep.mubr.bf16.mxu0 %v484
        %1734 = vmatmul.mubr.bf16.gmra.mrb[0].mxu0 %v483
        %v1735 = vpop.f32.mrb[0].mxu0
        %v1736 = vadd.f32 %v1639, %v1735
        %v1737 = vpop.f32.mrb[0].mxu0
        %v1738 = vpop.f32.mrb[0].mxu0
        %v1739 = vadd.f32 %v1642, %v1738
        %v1740 = vpop.f32.mrb[0].mxu0
        %1741 = vmatprep.mubr.bf16.mxu0 %v488
        %1742 = vmatmul.mubr.bf16.gmra.mrb[0].mxu0 %v487
        %v1743 = vpop.f32.mrb[0].mxu0
        %v1744 = vadd.f32 %v1647, %v1743
        %v1745 = vpop.f32.mrb[0].mxu0
        %v1746 = vpop.f32.mrb[0].mxu0
        %v1747 = vadd.f32 %v1650, %v1746
        %v1748 = vpop.f32.mrb[0].mxu0
        %1749 = vmatprep.mubr.bf16.mxu0 %v492
        %1750 = vmatmul.mubr.bf16.gmra.mrb[0].mxu0 %v491
        %v1751 = vpop.f32.mrb[0].mxu0
        %v1752 = vadd.f32 %v1655, %v1751
        %v1753 = vpop.f32.mrb[0].mxu0
        %v1754 = vpop.f32.mrb[0].mxu0
        %v1755 = vadd.f32 %v1658, %v1754
        %v1756 = vpop.f32.mrb[0].mxu0
        %1757 = vmatprep.mubr.bf16.mxu0 %v496
        %1758 = vmatmul.mubr.bf16.gmra.mrb[0].mxu0 %v495
        %v1759 = vpop.f32.mrb[0].mxu0
        %v1760 = vadd.f32 %v1663, %v1759
        %v1761 = vpop.f32.mrb[0].mxu0
        %v1762 = vpop.f32.mrb[0].mxu0
        %v1763 = vadd.f32 %v1666, %v1762
        %v1764 = vpop.f32.mrb[0].mxu0
        %1765 = vdwg.mxu0
        %v1766 = vld [vmem:[%s6] sm:$0x1]
        %v1767 = vlaneseq
        %v1768 = vshrl.u32 %v1767, 7
        %v1769 = vsub.s32 0, %v1768
        %v1770 = vrot.slane %v1766, %v1769
        %v1771 = vadd.f32 %v1704, %v1770
        %v1772 = vadd.f32 %v1707, %v1770
        %v1773 = vadd.f32 %v1712, %v1770
        %v1774 = vadd.f32 %v1715, %v1770
        %v1775 = vadd.f32 %v1720, %v1770
        %v1776 = vadd.f32 %v1723, %v1770
        %v1777 = vadd.f32 %v1728, %v1770
        %v1778 = vadd.f32 %v1731, %v1770
        %v1779 = vadd.f32 %v1736, %v1770
        %v1780 = vadd.f32 %v1739, %v1770
        %v1781 = vadd.f32 %v1744, %v1770
        %v1782 = vadd.f32 %v1747, %v1770
        %v1783 = vadd.f32 %v1752, %v1770
        %v1784 = vadd.f32 %v1755, %v1770
        %v1785 = vadd.f32 %v1760, %v1770
        %v1786 = vadd.f32 %v1763, %v1770
        %v1787 = vmax.f32 %v1771, 0.0
        %v1788 = vmax.f32 %v1772, 0.0
        %v1789 = vmax.f32 %v1773, 0.0
        %v1790 = vmax.f32 %v1774, 0.0
        %v1791 = vmax.f32 %v1775, 0.0
        %v1792 = vmax.f32 %v1776, 0.0
        %v1793 = vmax.f32 %v1777, 0.0
        %v1794 = vmax.f32 %v1778, 0.0
        %v1795 = vmax.f32 %v1779, 0.0
        %v1796 = vmax.f32 %v1780, 0.0
        %v1797 = vmax.f32 %v1781, 0.0
        %v1798 = vmax.f32 %v1782, 0.0
        %v1799 = vmax.f32 %v1783, 0.0
        %v1800 = vmax.f32 %v1784, 0.0
        %v1801 = vmax.f32 %v1785, 0.0
        %v1802 = vmax.f32 %v1786, 0.0
        %v1803 = vpack.c.bf16 %v1788, %v1787
        %v1804 = vpack.c.bf16 %v1790, %v1789
        %v1805 = vpack.c.bf16 %v1792, %v1791
        %v1806 = vpack.c.bf16 %v1794, %v1793
        %v1807 = vpack.c.bf16 %v1796, %v1795
        %v1808 = vpack.c.bf16 %v1798, %v1797
        %v1809 = vpack.c.bf16 %v1800, %v1799
        %v1810 = vpack.c.bf16 %v1802, %v1801
        %v1811 = vld [vmem:[#allocation10] sm:$0xf]
        %v1812 = vld [vmem:[#allocation10 + $0x4] sm:$0xf]
        %v1813 = vld [vmem:[#allocation10 + $0x8] sm:$0xf]
        %v1814 = vld [vmem:[#allocation10 + $0xc] sm:$0xf]
        %v1815 = vld [vmem:[#allocation10 + $0x10] sm:$0xf]
        %v1816 = vld [vmem:[#allocation10 + $0x14] sm:$0xf]
        %v1817 = vld [vmem:[#allocation10 + $0x18] sm:$0xf]
        %v1818 = vld [vmem:[#allocation10 + $0x1c] sm:$0xf]
        %v1819 = vld [vmem:[#allocation10 + $0x20] sm:$0xf]
        %v1820 = vld [vmem:[#allocation10 + $0x24] sm:$0xf]
        %v1821 = vld [vmem:[#allocation10 + $0x28] sm:$0xf]
        %v1822 = vld [vmem:[#allocation10 + $0x2c] sm:$0xf]
        %v1823 = vld [vmem:[#allocation10 + $0x30] sm:$0xf]
        %v1824 = vld [vmem:[#allocation10 + $0x34] sm:$0xf]
        %v1825 = vld [vmem:[#allocation10 + $0x38] sm:$0xf]
        %v1826 = vld [vmem:[#allocation10 + $0x3c] sm:$0xf]
        %v1827 = vld [vmem:[%s6 + $0x1] sm:$0x1]
        %v1828 = vlaneseq
        %v1829 = vshrl.u32 %v1828, 7
        %v1830 = vsub.s32 0, %v1829
        %v1831 = vrot.slane %v1827, %v1830
        %v1848 = vunpack.c.l.b16 %v1811
        %v1849 = vunpack.c.l.b16 %v1812
        %v1850 = vunpack.c.l.b16 %v1813
        %v1851 = vunpack.c.l.b16 %v1814
        %v1852 = vunpack.c.l.b16 %v1815
        %v1853 = vunpack.c.l.b16 %v1816
        %v1854 = vunpack.c.l.b16 %v1817
        %v1855 = vunpack.c.l.b16 %v1818
        %v1856 = vunpack.c.l.b16 %v1819
        %v1857 = vunpack.c.l.b16 %v1820
        %v1858 = vunpack.c.l.b16 %v1821
        %v1859 = vunpack.c.l.b16 %v1822
        %v1860 = vunpack.c.l.b16 %v1823
        %v1861 = vunpack.c.l.b16 %v1824
        %v1862 = vunpack.c.l.b16 %v1825
        %v1863 = vunpack.c.l.b16 %v1826
        %v1864 = vpack.c.b16 %v1849, %v1848
        %v1865 = vpack.c.b16 %v1851, %v1850
        %v1866 = vpack.c.b16 %v1853, %v1852
        %v1867 = vpack.c.b16 %v1855, %v1854
        %v1868 = vpack.c.b16 %v1857, %v1856
        %v1869 = vpack.c.b16 %v1859, %v1858
        %v1870 = vpack.c.b16 %v1861, %v1860
        %v1871 = vpack.c.b16 %v1863, %v1862
        %1880 = vmatprep.subr.bf16.mxu0 0
        %1881 = vmatpush1.bf16.msra.mxu0 %v1864
        %1882 = vmatprep.subr.bf16.mxu0 0
        %1883 = vmatpush1.bf16.msra.mxu0 %v1865
        %1884 = vmatprep.subr.bf16.mxu0 0
        %1885 = vmatpush1.bf16.msra.mxu0 %v1866
        %1886 = vmatprep.subr.bf16.mxu0 0
        %1887 = vmatpush1.bf16.msra.mxu0 %v1867
        %1888 = vmatprep.subr.bf16.mxu0 0
        %1889 = vmatpush1.bf16.msra.mxu0 %v1868
        %1890 = vmatprep.subr.bf16.mxu0 0
        %1891 = vmatpush1.bf16.msra.mxu0 %v1869
        %1892 = vmatprep.subr.bf16.mxu0 0
        %1893 = vmatpush1.bf16.msra.mxu0 %v1870
        %1894 = vmatprep.subr.bf16.mxu0 0
        %1895 = vmatpush1.bf16.msra.mxu0 %v1871
        %1896 = vmatprep.subr.bf16.mxu0 0
        %1897 = vmatpush1.bf16.msra.mxu0 0
        %1898 = vmatprep.subr.bf16.mxu0 0
        %1899 = vmatpush1.bf16.msra.mxu0 0
        %1900 = vmatprep.subr.bf16.mxu0 0
        %1901 = vmatpush1.bf16.msra.mxu0 0
        %1902 = vmatprep.subr.bf16.mxu0 0
        %1903 = vmatpush1.bf16.msra.mxu0 0
        %1904 = vmatprep.subr.bf16.mxu0 0
        %1905 = vmatpush1.bf16.msra.mxu0 0
        %1906 = vmatprep.subr.bf16.mxu0 0
        %1907 = vmatpush1.bf16.msra.mxu0 0
        %1908 = vmatprep.subr.bf16.mxu0 0
        %1909 = vmatpush1.bf16.msra.mxu0 0
        %1910 = vmatprep.subr.bf16.mxu0 0
        %1911 = vmatpush1.bf16.msra.mxu0 0
        %1912 = vmatprep.mubr.bf16.mxu0 0
        %1913 = vmatmul.mubr.bf16.gmra.mrb[0].mxu0 %v1803
        %v1914 = vpop.f32.mrb[0].mxu0
        %v1915 = vadd.f32 %v1831, %v1914
        %v1916 = vpop.f32.mrb[0].mxu0
        %v1917 = vpop.f32.mrb[0].mxu0
        %v1918 = vadd.f32 %v1831, %v1917
        %v1919 = vpop.f32.mrb[0].mxu0
        %1920 = vmatprep.mubr.bf16.mxu0 0
        %1921 = vmatmul.mubr.bf16.gmra.mrb[0].mxu0 %v1804
        %v1922 = vpop.f32.mrb[0].mxu0
        %v1923 = vadd.f32 %v1831, %v1922
        %v1924 = vpop.f32.mrb[0].mxu0
        %v1925 = vpop.f32.mrb[0].mxu0
        %v1926 = vadd.f32 %v1831, %v1925
        %v1927 = vpop.f32.mrb[0].mxu0
        %1928 = vmatprep.mubr.bf16.mxu0 0
        %1929 = vmatmul.mubr.bf16.gmra.mrb[0].mxu0 %v1805
        %v1930 = vpop.f32.mrb[0].mxu0
        %v1931 = vadd.f32 %v1831, %v1930
        %v1932 = vpop.f32.mrb[0].mxu0
        %v1933 = vpop.f32.mrb[0].mxu0
        %v1934 = vadd.f32 %v1831, %v1933
        %v1935 = vpop.f32.mrb[0].mxu0
        %1936 = vmatprep.mubr.bf16.mxu0 0
        %1937 = vmatmul.mubr.bf16.gmra.mrb[0].mxu0 %v1806
        %v1938 = vpop.f32.mrb[0].mxu0
        %v1939 = vadd.f32 %v1831, %v1938
        %v1940 = vpop.f32.mrb[0].mxu0
        %v1941 = vpop.f32.mrb[0].mxu0
        %v1942 = vadd.f32 %v1831, %v1941
        %v1943 = vpop.f32.mrb[0].mxu0
        %1944 = vmatprep.mubr.bf16.mxu0 0
        %1945 = vmatmul.mubr.bf16.gmra.mrb[0].mxu0 %v1807
        %v1946 = vpop.f32.mrb[0].mxu0
        %v1947 = vadd.f32 %v1831, %v1946
        %v1948 = vpop.f32.mrb[0].mxu0
        %v1949 = vpop.f32.mrb[0].mxu0
        %v1950 = vadd.f32 %v1831, %v1949
        %v1951 = vpop.f32.mrb[0].mxu0
        %1952 = vmatprep.mubr.bf16.mxu0 0
        %1953 = vmatmul.mubr.bf16.gmra.mrb[0].mxu0 %v1808
        %v1954 = vpop.f32.mrb[0].mxu0
        %v1955 = vadd.f32 %v1831, %v1954
        %v1956 = vpop.f32.mrb[0].mxu0
        %v1957 = vpop.f32.mrb[0].mxu0
        %v1958 = vadd.f32 %v1831, %v1957
        %v1959 = vpop.f32.mrb[0].mxu0
        %1960 = vmatprep.mubr.bf16.mxu0 0
        %1961 = vmatmul.mubr.bf16.gmra.mrb[0].mxu0 %v1809
        %v1962 = vpop.f32.mrb[0].mxu0
        %v1963 = vadd.f32 %v1831, %v1962
        %v1964 = vpop.f32.mrb[0].mxu0
        %v1965 = vpop.f32.mrb[0].mxu0
        %v1966 = vadd.f32 %v1831, %v1965
        %v1967 = vpop.f32.mrb[0].mxu0
        %1968 = vmatprep.mubr.bf16.mxu0 0
        %1969 = vmatmul.mubr.bf16.gmra.mrb[0].mxu0 %v1810
        %v1970 = vpop.f32.mrb[0].mxu0
        %v1971 = vadd.f32 %v1831, %v1970
        %v1972 = vpop.f32.mrb[0].mxu0
        %v1973 = vpop.f32.mrb[0].mxu0
        %v1974 = vadd.f32 %v1831, %v1973
        %v1975 = vpop.f32.mrb[0].mxu0
        %1976 = vdwg.mxu0
        %v1977 = vmax.f32 %v1915, 0.0
        %v1978 = vmax.f32 %v1918, 0.0
        %v1979 = vmax.f32 %v1923, 0.0
        %v1980 = vmax.f32 %v1926, 0.0
        %v1981 = vmax.f32 %v1931, 0.0
        %v1982 = vmax.f32 %v1934, 0.0
        %v1983 = vmax.f32 %v1939, 0.0
        %v1984 = vmax.f32 %v1942, 0.0
        %v1985 = vmax.f32 %v1947, 0.0
        %v1986 = vmax.f32 %v1950, 0.0
        %v1987 = vmax.f32 %v1955, 0.0
        %v1988 = vmax.f32 %v1958, 0.0
        %v1989 = vmax.f32 %v1963, 0.0
        %v1990 = vmax.f32 %v1966, 0.0
        %v1991 = vmax.f32 %v1971, 0.0
        %v1992 = vmax.f32 %v1974, 0.0
        %v1993 = vpack.c.bf16 %v1978, %v1977
        %v1994 = vpack.c.bf16 %v1980, %v1979
        %v1995 = vpack.c.bf16 %v1982, %v1981
        %v1996 = vpack.c.bf16 %v1984, %v1983
        %v1997 = vpack.c.bf16 %v1986, %v1985
        %v1998 = vpack.c.bf16 %v1988, %v1987
        %v1999 = vpack.c.bf16 %v1990, %v1989
        %v2000 = vpack.c.bf16 %v1992, %v1991
        %s2001 = scalar_lea.vmem [#allocation10], 64
        %v2002 = vld [vmem:[%s2001] sm:$0xf]
        %v2003 = vld [vmem:[%s2001 + $0x4] sm:$0xf]
        %v2004 = vld [vmem:[%s2001 + $0x8] sm:$0xf]
        %v2005 = vld [vmem:[%s2001 + $0xc] sm:$0xf]
        %v2006 = vld [vmem:[%s2001 + $0x10] sm:$0xf]
        %v2007 = vld [vmem:[%s2001 + $0x14] sm:$0xf]
        %v2008 = vld [vmem:[%s2001 + $0x18] sm:$0xf]
        %v2009 = vld [vmem:[%s2001 + $0x1c] sm:$0xf]
        %v2010 = vld [vmem:[%s2001 + $0x20] sm:$0xf]
        %v2011 = vld [vmem:[%s2001 + $0x24] sm:$0xf]
        %v2012 = vld [vmem:[%s2001 + $0x28] sm:$0xf]
        %v2013 = vld [vmem:[%s2001 + $0x2c] sm:$0xf]
        %v2014 = vld [vmem:[%s2001 + $0x30] sm:$0xf]
        %v2015 = vld [vmem:[%s2001 + $0x34] sm:$0xf]
        %v2016 = vld [vmem:[%s2001 + $0x38] sm:$0xf]
        %v2017 = vld [vmem:[%s2001 + $0x3c] sm:$0xf]
        %v2018 = vld [vmem:[%s6 + $0x2] sm:$0x1]
        %v2019 = vlaneseq
        %v2020 = vshrl.u32 %v2019, 7
        %v2021 = vsub.s32 0, %v2020
        %v2022 = vrot.slane %v2018, %v2021
        %v2039 = vunpack.c.l.b16 %v2002
        %v2040 = vunpack.c.l.b16 %v2003
        %v2041 = vunpack.c.l.b16 %v2004
        %v2042 = vunpack.c.l.b16 %v2005
        %v2043 = vunpack.c.l.b16 %v2006
        %v2044 = vunpack.c.l.b16 %v2007
        %v2045 = vunpack.c.l.b16 %v2008
        %v2046 = vunpack.c.l.b16 %v2009
        %v2047 = vunpack.c.l.b16 %v2010
        %v2048 = vunpack.c.l.b16 %v2011
        %v2049 = vunpack.c.l.b16 %v2012
        %v2050 = vunpack.c.l.b16 %v2013
        %v2051 = vunpack.c.l.b16 %v2014
        %v2052 = vunpack.c.l.b16 %v2015
        %v2053 = vunpack.c.l.b16 %v2016
        %v2054 = vunpack.c.l.b16 %v2017
        %v2055 = vpack.c.b16 %v2040, %v2039
        %v2056 = vpack.c.b16 %v2042, %v2041
        %v2057 = vpack.c.b16 %v2044, %v2043
        %v2058 = vpack.c.b16 %v2046, %v2045
        %v2059 = vpack.c.b16 %v2048, %v2047
        %v2060 = vpack.c.b16 %v2050, %v2049
        %v2061 = vpack.c.b16 %v2052, %v2051
        %v2062 = vpack.c.b16 %v2054, %v2053
        %2071 = vmatprep.subr.bf16.mxu0 0
        %2072 = vmatpush1.bf16.msra.mxu0 %v2055
        %2073 = vmatprep.subr.bf16.mxu0 0
        %2074 = vmatpush1.bf16.msra.mxu0 %v2056
        %2075 = vmatprep.subr.bf16.mxu0 0
        %2076 = vmatpush1.bf16.msra.mxu0 %v2057
        %2077 = vmatprep.subr.bf16.mxu0 0
        %2078 = vmatpush1.bf16.msra.mxu0 %v2058
        %2079 = vmatprep.subr.bf16.mxu0 0
        %2080 = vmatpush1.bf16.msra.mxu0 %v2059
        %2081 = vmatprep.subr.bf16.mxu0 0
        %2082 = vmatpush1.bf16.msra.mxu0 %v2060
        %2083 = vmatprep.subr.bf16.mxu0 0
        %2084 = vmatpush1.bf16.msra.mxu0 %v2061
        %2085 = vmatprep.subr.bf16.mxu0 0
        %2086 = vmatpush1.bf16.msra.mxu0 %v2062
        %2087 = vmatprep.subr.bf16.mxu0 0
        %2088 = vmatpush1.bf16.msra.mxu0 0
        %2089 = vmatprep.subr.bf16.mxu0 0
        %2090 = vmatpush1.bf16.msra.mxu0 0
        %2091 = vmatprep.subr.bf16.mxu0 0
        %2092 = vmatpush1.bf16.msra.mxu0 0
        %2093 = vmatprep.subr.bf16.mxu0 0
        %2094 = vmatpush1.bf16.msra.mxu0 0
        %2095 = vmatprep.subr.bf16.mxu0 0
        %2096 = vmatpush1.bf16.msra.mxu0 0
        %2097 = vmatprep.subr.bf16.mxu0 0
        %2098 = vmatpush1.bf16.msra.mxu0 0
        %2099 = vmatprep.subr.bf16.mxu0 0
        %2100 = vmatpush1.bf16.msra.mxu0 0
        %2101 = vmatprep.subr.bf16.mxu0 0
        %2102 = vmatpush1.bf16.msra.mxu0 0
        %2103 = vmatprep.mubr.bf16.mxu0 0
        %2104 = vmatmul.mubr.bf16.gmra.mrb[0].mxu0 %v1993
        %v2105 = vpop.f32.mrb[0].mxu0
        %v2106 = vadd.f32 %v2022, %v2105
        %v2107 = vpop.f32.mrb[0].mxu0
        %v2108 = vpop.f32.mrb[0].mxu0
        %v2109 = vadd.f32 %v2022, %v2108
        %v2110 = vpop.f32.mrb[0].mxu0
        %2111 = vmatprep.mubr.bf16.mxu0 0
        %2112 = vmatmul.mubr.bf16.gmra.mrb[0].mxu0 %v1994
        %v2113 = vpop.f32.mrb[0].mxu0
        %v2114 = vadd.f32 %v2022, %v2113
        %v2115 = vpop.f32.mrb[0].mxu0
        %v2116 = vpop.f32.mrb[0].mxu0
        %v2117 = vadd.f32 %v2022, %v2116
        %v2118 = vpop.f32.mrb[0].mxu0
        %2119 = vmatprep.mubr.bf16.mxu0 0
        %2120 = vmatmul.mubr.bf16.gmra.mrb[0].mxu0 %v1995
        %v2121 = vpop.f32.mrb[0].mxu0
        %v2122 = vadd.f32 %v2022, %v2121
        %v2123 = vpop.f32.mrb[0].mxu0
        %v2124 = vpop.f32.mrb[0].mxu0
        %v2125 = vadd.f32 %v2022, %v2124
        %v2126 = vpop.f32.mrb[0].mxu0
        %2127 = vmatprep.mubr.bf16.mxu0 0
        %2128 = vmatmul.mubr.bf16.gmra.mrb[0].mxu0 %v1996
        %v2129 = vpop.f32.mrb[0].mxu0
        %v2130 = vadd.f32 %v2022, %v2129
        %v2131 = vpop.f32.mrb[0].mxu0
        %v2132 = vpop.f32.mrb[0].mxu0
        %v2133 = vadd.f32 %v2022, %v2132
        %v2134 = vpop.f32.mrb[0].mxu0
        %2135 = vmatprep.mubr.bf16.mxu0 0
        %2136 = vmatmul.mubr.bf16.gmra.mrb[0].mxu0 %v1997
        %v2137 = vpop.f32.mrb[0].mxu0
        %v2138 = vadd.f32 %v2022, %v2137
        %v2139 = vpop.f32.mrb[0].mxu0
        %v2140 = vpop.f32.mrb[0].mxu0
        %v2141 = vadd.f32 %v2022, %v2140
        %v2142 = vpop.f32.mrb[0].mxu0
        %2143 = vmatprep.mubr.bf16.mxu0 0
        %2144 = vmatmul.mubr.bf16.gmra.mrb[0].mxu0 %v1998
        %v2145 = vpop.f32.mrb[0].mxu0
        %v2146 = vadd.f32 %v2022, %v2145
        %v2147 = vpop.f32.mrb[0].mxu0
        %v2148 = vpop.f32.mrb[0].mxu0
        %v2149 = vadd.f32 %v2022, %v2148
        %v2150 = vpop.f32.mrb[0].mxu0
        %2151 = vmatprep.mubr.bf16.mxu0 0
        %2152 = vmatmul.mubr.bf16.gmra.mrb[0].mxu0 %v1999
        %v2153 = vpop.f32.mrb[0].mxu0
        %v2154 = vadd.f32 %v2022, %v2153
        %v2155 = vpop.f32.mrb[0].mxu0
        %v2156 = vpop.f32.mrb[0].mxu0
        %v2157 = vadd.f32 %v2022, %v2156
        %v2158 = vpop.f32.mrb[0].mxu0
        %2159 = vmatprep.mubr.bf16.mxu0 0
        %2160 = vmatmul.mubr.bf16.gmra.mrb[0].mxu0 %v2000
        %v2161 = vpop.f32.mrb[0].mxu0
        %v2162 = vadd.f32 %v2022, %v2161
        %v2163 = vpop.f32.mrb[0].mxu0
        %v2164 = vpop.f32.mrb[0].mxu0
        %v2165 = vadd.f32 %v2022, %v2164
        %v2166 = vpop.f32.mrb[0].mxu0
        %2167 = vdwg.mxu0
        %v2168 = vmax.f32 %v2106, 0.0
        %v2169 = vmax.f32 %v2109, 0.0
        %v2170 = vmax.f32 %v2114, 0.0
        %v2171 = vmax.f32 %v2117, 0.0
        %v2172 = vmax.f32 %v2122, 0.0
        %v2173 = vmax.f32 %v2125, 0.0
        %v2174 = vmax.f32 %v2130, 0.0
        %v2175 = vmax.f32 %v2133, 0.0
        %v2176 = vmax.f32 %v2138, 0.0
        %v2177 = vmax.f32 %v2141, 0.0
        %v2178 = vmax.f32 %v2146, 0.0
        %v2179 = vmax.f32 %v2149, 0.0
        %v2180 = vmax.f32 %v2154, 0.0
        %v2181 = vmax.f32 %v2157, 0.0
        %v2182 = vmax.f32 %v2162, 0.0
        %v2183 = vmax.f32 %v2165, 0.0
        %v2184 = vpack.c.bf16 %v2169, %v2168
        %v2185 = vpack.c.bf16 %v2171, %v2170
        %v2186 = vpack.c.bf16 %v2173, %v2172
        %v2187 = vpack.c.bf16 %v2175, %v2174
        %v2188 = vpack.c.bf16 %v2177, %v2176
        %v2189 = vpack.c.bf16 %v2179, %v2178
        %v2190 = vpack.c.bf16 %v2181, %v2180
        %v2191 = vpack.c.bf16 %v2183, %v2182
        %v2192 = vld [vmem:[#allocation11] sm:$0xf]
        %v2193 = vld [vmem:[#allocation11 + $0x4] sm:$0xf]
        %v2194 = vld [vmem:[#allocation11 + $0x8] sm:$0xf]
        %v2195 = vld [vmem:[#allocation11 + $0xc] sm:$0xf]
        %v2196 = vld [vmem:[#allocation11 + $0x10] sm:$0xf]
        %v2197 = vld [vmem:[#allocation11 + $0x14] sm:$0xf]
        %v2198 = vld [vmem:[#allocation11 + $0x18] sm:$0xf]
        %v2199 = vld [vmem:[#allocation11 + $0x1c] sm:$0xf]
        %v2200 = vld [vmem:[#allocation11 + $0x20] sm:$0xf]
        %v2201 = vld [vmem:[#allocation11 + $0x24] sm:$0xf]
        %v2202 = vld [vmem:[#allocation11 + $0x28] sm:$0xf]
        %v2203 = vld [vmem:[#allocation11 + $0x2c] sm:$0xf]
        %v2204 = vld [vmem:[#allocation11 + $0x30] sm:$0xf]
        %v2205 = vld [vmem:[#allocation11 + $0x34] sm:$0xf]
        %v2206 = vld [vmem:[#allocation11 + $0x38] sm:$0xf]
        %v2207 = vld [vmem:[#allocation11 + $0x3c] sm:$0xf]
        %v2208 = vld [vmem:[%s6 + $0x3] sm:$0x1]
        %v2209 = vlaneseq
        %v2210 = vshrl.u32 %v2209, 7
        %v2211 = vsub.s32 0, %v2210
        %v2212 = vrot.slane %v2208, %v2211
        %v2229 = vunpack.c.l.b16 %v2192
        %v2230 = vunpack.c.l.b16 %v2193
        %v2231 = vunpack.c.l.b16 %v2194
        %v2232 = vunpack.c.l.b16 %v2195
        %v2233 = vunpack.c.l.b16 %v2196
        %v2234 = vunpack.c.l.b16 %v2197
        %v2235 = vunpack.c.l.b16 %v2198
        %v2236 = vunpack.c.l.b16 %v2199
        %v2237 = vunpack.c.l.b16 %v2200
        %v2238 = vunpack.c.l.b16 %v2201
        %v2239 = vunpack.c.l.b16 %v2202
        %v2240 = vunpack.c.l.b16 %v2203
        %v2241 = vunpack.c.l.b16 %v2204
        %v2242 = vunpack.c.l.b16 %v2205
        %v2243 = vunpack.c.l.b16 %v2206
        %v2244 = vunpack.c.l.b16 %v2207
        %v2245 = vpack.c.b16 %v2230, %v2229
        %v2246 = vpack.c.b16 %v2232, %v2231
        %v2247 = vpack.c.b16 %v2234, %v2233
        %v2248 = vpack.c.b16 %v2236, %v2235
        %v2249 = vpack.c.b16 %v2238, %v2237
        %v2250 = vpack.c.b16 %v2240, %v2239
        %v2251 = vpack.c.b16 %v2242, %v2241
        %v2252 = vpack.c.b16 %v2244, %v2243
        %2261 = vmatprep.subr.bf16.mxu0 0
        %2262 = vmatpush1.bf16.msra.mxu0 %v2245
        %2263 = vmatprep.subr.bf16.mxu0 0
        %2264 = vmatpush1.bf16.msra.mxu0 %v2246
        %2265 = vmatprep.subr.bf16.mxu0 0
        %2266 = vmatpush1.bf16.msra.mxu0 %v2247
        %2267 = vmatprep.subr.bf16.mxu0 0
        %2268 = vmatpush1.bf16.msra.mxu0 %v2248
        %2269 = vmatprep.subr.bf16.mxu0 0
        %2270 = vmatpush1.bf16.msra.mxu0 %v2249
        %2271 = vmatprep.subr.bf16.mxu0 0
        %2272 = vmatpush1.bf16.msra.mxu0 %v2250
        %2273 = vmatprep.subr.bf16.mxu0 0
        %2274 = vmatpush1.bf16.msra.mxu0 %v2251
        %2275 = vmatprep.subr.bf16.mxu0 0
        %2276 = vmatpush1.bf16.msra.mxu0 %v2252
        %2277 = vmatprep.subr.bf16.mxu0 0
        %2278 = vmatpush1.bf16.msra.mxu0 0
        %2279 = vmatprep.subr.bf16.mxu0 0
        %2280 = vmatpush1.bf16.msra.mxu0 0
        %2281 = vmatprep.subr.bf16.mxu0 0
        %2282 = vmatpush1.bf16.msra.mxu0 0
        %2283 = vmatprep.subr.bf16.mxu0 0
        %2284 = vmatpush1.bf16.msra.mxu0 0
        %2285 = vmatprep.subr.bf16.mxu0 0
        %2286 = vmatpush1.bf16.msra.mxu0 0
        %2287 = vmatprep.subr.bf16.mxu0 0
        %2288 = vmatpush1.bf16.msra.mxu0 0
        %2289 = vmatprep.subr.bf16.mxu0 0
        %2290 = vmatpush1.bf16.msra.mxu0 0
        %2291 = vmatprep.subr.bf16.mxu0 0
        %2292 = vmatpush1.bf16.msra.mxu0 0
        %2293 = vmatprep.mubr.bf16.mxu0 0
        %2294 = vmatmul.mubr.bf16.gmra.mrb[0].mxu0 %v2184
        %v2295 = vpop.f32.mrb[0].mxu0
        %v2296 = vadd.f32 %v2212, %v2295
        %v2297 = vpop.f32.mrb[0].mxu0
        %v2298 = vpop.f32.mrb[0].mxu0
        %v2299 = vadd.f32 %v2212, %v2298
        %v2300 = vpop.f32.mrb[0].mxu0
        %2301 = vmatprep.mubr.bf16.mxu0 0
        %2302 = vmatmul.mubr.bf16.gmra.mrb[0].mxu0 %v2185
        %v2303 = vpop.f32.mrb[0].mxu0
        %v2304 = vadd.f32 %v2212, %v2303
        %v2305 = vpop.f32.mrb[0].mxu0
        %v2306 = vpop.f32.mrb[0].mxu0
        %v2307 = vadd.f32 %v2212, %v2306
        %v2308 = vpop.f32.mrb[0].mxu0
        %2309 = vmatprep.mubr.bf16.mxu0 0
        %2310 = vmatmul.mubr.bf16.gmra.mrb[0].mxu0 %v2186
        %v2311 = vpop.f32.mrb[0].mxu0
        %v2312 = vadd.f32 %v2212, %v2311
        %v2313 = vpop.f32.mrb[0].mxu0
        %v2314 = vpop.f32.mrb[0].mxu0
        %v2315 = vadd.f32 %v2212, %v2314
        %v2316 = vpop.f32.mrb[0].mxu0
        %2317 = vmatprep.mubr.bf16.mxu0 0
        %2318 = vmatmul.mubr.bf16.gmra.mrb[0].mxu0 %v2187
        %v2319 = vpop.f32.mrb[0].mxu0
        %v2320 = vadd.f32 %v2212, %v2319
        %v2321 = vpop.f32.mrb[0].mxu0
        %v2322 = vpop.f32.mrb[0].mxu0
        %v2323 = vadd.f32 %v2212, %v2322
        %v2324 = vpop.f32.mrb[0].mxu0
        %2325 = vmatprep.mubr.bf16.mxu0 0
        %2326 = vmatmul.mubr.bf16.gmra.mrb[0].mxu0 %v2188
        %v2327 = vpop.f32.mrb[0].mxu0
        %v2328 = vadd.f32 %v2212, %v2327
        %v2329 = vpop.f32.mrb[0].mxu0
        %v2330 = vpop.f32.mrb[0].mxu0
        %v2331 = vadd.f32 %v2212, %v2330
        %v2332 = vpop.f32.mrb[0].mxu0
        %2333 = vmatprep.mubr.bf16.mxu0 0
        %2334 = vmatmul.mubr.bf16.gmra.mrb[0].mxu0 %v2189
        %v2335 = vpop.f32.mrb[0].mxu0
        %v2336 = vadd.f32 %v2212, %v2335
        %v2337 = vpop.f32.mrb[0].mxu0
        %v2338 = vpop.f32.mrb[0].mxu0
        %v2339 = vadd.f32 %v2212, %v2338
        %v2340 = vpop.f32.mrb[0].mxu0
        %2341 = vmatprep.mubr.bf16.mxu0 0
        %2342 = vmatmul.mubr.bf16.gmra.mrb[0].mxu0 %v2190
        %v2343 = vpop.f32.mrb[0].mxu0
        %v2344 = vadd.f32 %v2212, %v2343
        %v2345 = vpop.f32.mrb[0].mxu0
        %v2346 = vpop.f32.mrb[0].mxu0
        %v2347 = vadd.f32 %v2212, %v2346
        %v2348 = vpop.f32.mrb[0].mxu0
        %2349 = vmatprep.mubr.bf16.mxu0 0
        %2350 = vmatmul.mubr.bf16.gmra.mrb[0].mxu0 %v2191
        %v2351 = vpop.f32.mrb[0].mxu0
        %v2352 = vadd.f32 %v2212, %v2351
        %v2353 = vpop.f32.mrb[0].mxu0
        %v2354 = vpop.f32.mrb[0].mxu0
        %v2355 = vadd.f32 %v2212, %v2354
        %v2356 = vpop.f32.mrb[0].mxu0
        %2357 = vdwg.mxu0
        %2358 = vst [vmem:[%s396] sm:$0xff] %v2296
        %2359 = vst [vmem:[%s396 + $0x8] sm:$0xff] %v2299
        %2360 = vst [vmem:[%s396 + $0x10] sm:$0xff] %v2304
        %2361 = vst [vmem:[%s396 + $0x18] sm:$0xff] %v2307
        %2362 = vst [vmem:[%s396 + $0x20] sm:$0xff] %v2312
        %2363 = vst [vmem:[%s396 + $0x28] sm:$0xff] %v2315
        %2364 = vst [vmem:[%s396 + $0x30] sm:$0xff] %v2320
        %2365 = vst [vmem:[%s396 + $0x38] sm:$0xff] %v2323
        %2366 = vst [vmem:[%s396 + $0x40] sm:$0xff] %v2328
        %2367 = vst [vmem:[%s396 + $0x48] sm:$0xff] %v2331
        %2368 = vst [vmem:[%s396 + $0x50] sm:$0xff] %v2336
        %2369 = vst [vmem:[%s396 + $0x58] sm:$0xff] %v2339
        %2370 = vst [vmem:[%s396 + $0x60] sm:$0xff] %v2344
        %2371 = vst [vmem:[%s396 + $0x68] sm:$0xff] %v2347
        %2372 = vst [vmem:[%s396 + $0x70] sm:$0xff] %v2352
        %2373 = vst [vmem:[%s396 + $0x78] sm:$0xff] %v2355
        %s2374 = sand.u32 %s194, 1
        %s2375 = scalar_lea.sflag [#allocation4], %s2374
        %s2376 = sand.u32 %s194, 1
        %s2377 = smul.addr %s2376, 128
        %s2378 = scalar_lea.vmem [#allocation13], %s2377
        // Predicated region
        $region73: #{tpu_custom_call.1} parent=47 // pred_check
          %p2379 = pneg %p204
        $region74: #{tpu_custom_call.1} parent=47 // pred_check_branch
          %2381 = sbr.rel (%p2379) target = $region76
        $region75: #{tpu_custom_call.1} parent=47 // pred_region
          %s2382 = smul.u32 16, %s29
          %s2384 = ssub.s32 2048, 2048
          %2385 = vsyncadd %s2375, %s2384
          %s2386 = smul.addr %s2382, 128
          %s2387 = scalar_lea.hbm %s7, %s2386
          %s2388 = sshll.u32 %s2378, 4
          %s2389 = int_to_ptr.vmem [resolvable:$true] %s2388
          %2394 = dma.vmem_to_hbm [thread:$0]  %s2389, 2048, %s2387, %s2375, 128, 128, 8
        $region76: #{tpu_custom_call.1} parent=47 // pred_fallthru
          _
      $region48: #{tpu_custom_call.1} parent=5 // pred_fallthru
        _
      %p2395 = scmp.le.s32.totalorder 2, %s24
      // Predicated region
      $region77: #{tpu_custom_call.1} parent=5 // pred_check
        %p2396 = pneg %p2395
      $region78: #{tpu_custom_call.1} parent=5 // pred_check_branch
        %2398 = sbr.rel (%p2396) target = $region80
      $region79: #{tpu_custom_call.1} parent=5 // pred_region
        %s2399 = ssub.s32 %s24, 2
        // Predicated region
        $region81: #{tpu_custom_call.1} parent=79 // pred_check
          %p2400 = pneg %p210
        $region82: #{tpu_custom_call.1} parent=79 // pred_check_branch
          %2402 = sbr.rel (%p2400) target = $region84
        $region83: #{tpu_custom_call.1} parent=79 // pred_region
          %s2403 = sand.u32 %s195, 1
          %s2404 = scalar_lea.sflag [#allocation4], %s2403
          %s2405 = sand.u32 %s195, 1
          %s2406 = smul.addr %s2405, 128
          %s2407 = scalar_lea.vmem [#allocation13], %s2406
          %2408 = dma.done %s2404, 2048
        $region84: #{tpu_custom_call.1} parent=79 // pred_fallthru
          _
      $region80: #{tpu_custom_call.1} parent=5 // pred_fallthru
        _
    $region6: #{tpu_custom_call.1} parent=1 // loop_footer
      %s28 = sadd.s32 1, %s24
    $region7: #{tpu_custom_call.1} parent=1 // loop_footer_branch
      %23 = sbr.rel target = $region3
    $region8: #{tpu_custom_call.1} parent=1 // loop_exit
      _
    %2409 = vsyncpa [#allocation3], 1
    %s2410 = scalar_lea.sflag [#allocation3], 1
    %2411 = vsyncpa %s2410, 1
    %2412 = vsyncpa [#allocation6], 1
    %s2413 = scalar_lea.sflag [#allocation6], 1
    %2414 = vsyncpa %s2413, 1
    %2415 = vsyncpa [#allocation9], 1
    %2416 = vsyncpa [#allocation12], 1
    %2417 = vsyncpa [#allocation4], 1
    %s2418 = scalar_lea.sflag [#allocation4], 1
    %2419 = vsyncpa %s2418, 1

</llo_original>
